<compile_context>
chip_gen: v5e
topology: v5e:2x2
jax: 0.10.0
libtpu: 0.0.40
codegen_flags: <defaults>
</compile_context>

<pallas_src>
import jax
import jax.numpy as jnp
from jax import lax
from jax.experimental import pallas as pl
from jax.experimental.pallas import tpu as pltpu


def _round_up(x, m):
    return ((x + m - 1) // m) * m


def _rep(shape):
    """BlockSpec for a weight replicated across the whole 2-D grid."""
    nd = len(shape)
    return pl.BlockSpec(shape, lambda i, j, _nd=nd: (0,) * _nd)


# -----------------------------------------------------------------------------
# Fused kernel: graph MLP + model MLP + all-pairs NCF scoring for one
# (Tg graphs) x (Tm models) tile.
# -----------------------------------------------------------------------------
def ncf_fused_kernel(m_ref, gw1_ref, gb1_ref, gw2_ref, gb2_ref,
                     mf_ref, mw1_ref, mb1_ref, mw2_ref, mb2_ref,
                     w1a_ref, w1b_ref, b1_ref, v_ref, wb_ref, c_ref, o_ref):
    # graph-side MLP: Linear -> ReLU -> Dropout(identity) -> Linear   (Tg, H)
    gh = jnp.maximum(
        jnp.dot(m_ref[...], gw1_ref[...], preferred_element_type=jnp.float32)
        + gb1_ref[...], 0.0)
    ge = jnp.dot(gh, gw2_ref[...], preferred_element_type=jnp.float32) + gb2_ref[...]

    # model-side MLP: Linear -> ReLU -> Dropout(identity) -> Linear   (Tm, H)
    mh = jnp.maximum(
        jnp.dot(mf_ref[...], mw1_ref[...], preferred_element_type=jnp.float32)
        + mb1_ref[...], 0.0)
    me = jnp.dot(mh, mw2_ref[...], preferred_element_type=jnp.float32) + mb2_ref[...]

    # split concat_W.0 over the concatenated [h_g, h_m]; fold its bias b1 into
    # the model-side projection (computed once per (Tm,H) tile, not per pair).
    a = jnp.dot(ge, w1a_ref[...], preferred_element_type=jnp.float32)            # (Tg, H)
    b = jnp.dot(me, w1b_ref[...], preferred_element_type=jnp.float32) + b1_ref[...]  # (Tm, H)

    # broadcast branch: ReLU over all pairs, then lane-reduce against v
    # (v = concat_W.2 @ last_W[:H], both linear so they fold).
    hidden = jnp.maximum(a[:, None, :] + b[None, :, :], 0.0)                     # (Tg, Tm, H)
    part_mlp = jnp.sum(hidden * v_ref[...][None, :, :], axis=-1)                 # (Tg, Tm)

    # (h_g * h_m) branch folded with last_W[H:] -> diagonal-scaled matmul.
    part_elem = lax.dot_general(ge * wb_ref[...], me,
                                dimension_numbers=(((1,), (1,)), ((), ())),
                                preferred_element_type=jnp.float32)              # (Tg, Tm)

    # c (cb2 @ last_W[:H] + last_b) is a true scalar -> SMEM.
    o_ref[...] = (part_mlp + part_elem + c_ref[0, 0]).astype(o_ref.dtype)


# -----------------------------------------------------------------------------
# Wrapper: parameter folding, padding to lane/sublane-aligned tiles, one call.
# -----------------------------------------------------------------------------
def ncf_forward(M, p, hid_dim):
    H = hid_dim
    G, nmf = M.shape
    Mn, mfd = p['model_feats'].shape

    # ---- fold the NCF head (pure linear algebra on weights, done once) ----
    w1a = p['cw1'][:H, :]                                     # acts on h_g
    w1b = p['cw1'][H:, :]                                     # acts on h_m
    b1 = p['cb1']                                             # (1, H)
    v = (p['cw2'] @ p['lw'][:H, :]).reshape(1, H)             # cw2 @ last_W[:H]
    wb = p['lw'][H:, :].reshape(1, H)                         # last_W[H:]
    c = (p['cb2'] @ p['lw'][:H, :] + p['lb']).reshape(1, 1)   # scalar offset

    # ---- tile sizes: sublane-aligned graph tiles, lane-dense model tiles ----
    # Caps keep the (Tg, Tm, H) f32 hidden intermediate small enough for the
    # v7x 32 MiB scoped-VMEM default even at H=128.
    Tg = min(128, _round_up(G, 8))
    Tm = min(256, _round_up(Mn, 128))
    G_pad = _round_up(G, Tg)
    Mn_pad = _round_up(Mn, Tm)

    M_p = jnp.pad(M, ((0, G_pad - G), (0, 0)))
    mf_p = jnp.pad(p['model_feats'], ((0, Mn_pad - Mn), (0, 0)))

    grid = (G_pad // Tg, Mn_pad // Tm)

    out = pl.pallas_call(
        ncf_fused_kernel,
        out_shape=jax.ShapeDtypeStruct((G_pad, Mn_pad), jnp.float32),
        grid=grid,
        in_specs=[
            pl.BlockSpec((Tg, nmf), lambda i, j: (i, 0)),      # meta-features tile
            _rep(p['gt_w1'].shape), _rep(p['gt_b1'].shape),
            _rep(p['gt_w2'].shape), _rep(p['gt_b2'].shape),
            pl.BlockSpec((Tm, mfd), lambda i, j: (j, 0)),      # model-features tile
            _rep(p['mt_w1'].shape), _rep(p['mt_b1'].shape),
            _rep(p['mt_w2'].shape), _rep(p['mt_b2'].shape),
            _rep(w1a.shape), _rep(w1b.shape), _rep(b1.shape),
            _rep(v.shape), _rep(wb.shape),
            pl.BlockSpec(memory_space=pltpu.SMEM),             # scalar offset c
        ],
        out_specs=pl.BlockSpec((Tg, Tm), lambda i, j: (i, j)),
        compiler_params=pltpu.CompilerParams(
            dimension_semantics=("parallel", "parallel")),
    )(M_p, p['gt_w1'], p['gt_b1'], p['gt_w2'], p['gt_b2'],
      mf_p, p['mt_w1'], p['mt_b1'], p['mt_w2'], p['mt_b2'],
      w1a, w1b, b1, v, wb, c)

    return out[:G, :Mn]


# -----------------------------------------------------------------------------
# Parameter setup
# -----------------------------------------------------------------------------
def init_params(key, hid_dim, model_feats_dim, num_meta_feats, num_models):
    ks = jax.random.split(key, 16)
    s = 0.1
    f = jnp.float32
    p = {
        # nn.Embedding(num_models, model_feats_dim)
        'model_feats': jax.random.normal(ks[0], (num_models, model_feats_dim), f),
        # model_transform: Linear(mfd, 4h) -> ReLU -> Dropout -> Linear(4h, h)
        'mt_w1': s * jax.random.normal(ks[1], (model_feats_dim, 4 * hid_dim), f),
        'mt_b1': s * jax.random.normal(ks[2], (1, 4 * hid_dim), f),
        'mt_w2': s * jax.random.normal(ks[3], (4 * hid_dim, hid_dim), f),
        'mt_b2': s * jax.random.normal(ks[4], (1, hid_dim), f),
        # meat_feat_transform: Linear(nmf, 4h) -> ReLU -> Dropout -> Linear(4h, h)
        'gt_w1': s * jax.random.normal(ks[5], (num_meta_feats, 4 * hid_dim), f),
        'gt_b1': s * jax.random.normal(ks[6], (1, 4 * hid_dim), f),
        'gt_w2': s * jax.random.normal(ks[7], (4 * hid_dim, hid_dim), f),
        'gt_b2': s * jax.random.normal(ks[8], (1, hid_dim), f),
        # NCFPredictor.concat_W: Linear(2h, h) -> ReLU -> Linear(h, h)
        'cw1': s * jax.random.normal(ks[9], (2 * hid_dim, hid_dim), f),
        'cb1': s * jax.random.normal(ks[10], (1, hid_dim), f),
        'cw2': s * jax.random.normal(ks[11], (hid_dim, hid_dim), f),
        'cb2': s * jax.random.normal(ks[12], (1, hid_dim), f),
        # NCFPredictor.last_W: Linear(2h, 1)
        'lw': s * jax.random.normal(ks[13], (2 * hid_dim, 1), f),
        'lb': s * jax.random.normal(ks[14], (1,), f),
    }
    return p


# -----------------------------------------------------------------------------
# Pure-JAX reference (mirrors the PyTorch module exactly, eval mode)
# -----------------------------------------------------------------------------
def reference_forward(M, p):
    def mlp(x, w1, b1, w2, b2):
        return jnp.maximum(x @ w1 + b1, 0.0) @ w2 + b2

    ge = mlp(M, p['gt_w1'], p['gt_b1'], p['gt_w2'], p['gt_b2'])
    me = mlp(p['model_feats'], p['mt_w1'], p['mt_b1'], p['mt_w2'], p['mt_b2'])
    G = ge.shape[0]
    Mn = me.shape[0]
    # edges: graph_idx.repeat_interleave(num_models), model_idx.repeat(num_graphs)
    hu = jnp.repeat(ge, Mn, axis=0)
    hv = jnp.tile(me, (G, 1))
    cat = jnp.concatenate([hu, hv], axis=1)
    ch = jnp.maximum(cat @ p['cw1'] + p['cb1'], 0.0) @ p['cw2'] + p['cb2']
    cat2 = jnp.concatenate([ch, hu * hv], axis=1)
    score = cat2 @ p['lw'] + p['lb']
    return score.reshape(G, Mn)


if __name__ == "__main__":
    hid_dim = 32
    model_feats_dim = 16
    num_meta_feats = 24
    num_models = 8
    num_graphs = 4

    key = jax.random.PRNGKey(0)
    k_param, k_in = jax.random.split(key)
    params = init_params(k_param, hid_dim, model_feats_dim, num_meta_feats, num_models)
    M = jax.random.normal(k_in, (num_graphs, num_meta_feats), jnp.float32)

    scores = ncf_forward(M, params, hid_dim)
    scores = jax.block_until_ready(scores)

    ref = reference_forward(M, params)
    assert scores.shape == (num_graphs, num_models), scores.shape
    assert jnp.allclose(scores, ref, atol=1e-4, rtol=1e-4), \
        f"max abs diff {jnp.max(jnp.abs(scores - ref))}"

    # TODO(synk): training path (fit / Adam / early stopping) is out of scope;
    # only the eval-mode forward is implemented.
    print("KERNEL_OK")
</pallas_src>

<mosaic_0001>
module attributes {stable_mosaic.version = 11 : i64} {
  func.func @ncf_fused_kernel(%arg0: i32, %arg1: i32, %arg2: memref<8x24xf32, #tpu.memory_space<vmem>>, %arg3: memref<24x128xf32, #tpu.memory_space<vmem>>, %arg4: memref<1x128xf32, #tpu.memory_space<vmem>>, %arg5: memref<128x32xf32, #tpu.memory_space<vmem>>, %arg6: memref<1x32xf32, #tpu.memory_space<vmem>>, %arg7: memref<128x16xf32, #tpu.memory_space<vmem>>, %arg8: memref<16x128xf32, #tpu.memory_space<vmem>>, %arg9: memref<1x128xf32, #tpu.memory_space<vmem>>, %arg10: memref<128x32xf32, #tpu.memory_space<vmem>>, %arg11: memref<1x32xf32, #tpu.memory_space<vmem>>, %arg12: memref<32x32xf32, #tpu.memory_space<vmem>>, %arg13: memref<32x32xf32, #tpu.memory_space<vmem>>, %arg14: memref<1x32xf32, #tpu.memory_space<vmem>>, %arg15: memref<1x32xf32, #tpu.memory_space<vmem>>, %arg16: memref<1x32xf32, #tpu.memory_space<vmem>>, %arg17: memref<1x1xf32, #tpu.memory_space<smem>>, %arg18: memref<8x128xf32, #tpu.memory_space<vmem>>) attributes {dimension_semantics = [#tpu.dimension_semantics<parallel>, #tpu.dimension_semantics<parallel>], iteration_bounds = array<i64: 1, 1>, scalar_prefetch = 0 : i64, scratch_operands = 0 : i64, tpu.core_type = #tpu.core_type<tc>, window_params = [{transform_indices = @transform_0, window_bounds = array<i64: 8, 24>}, {pipeline_mode = #tpu.pipeline_mode<synchronous>, transform_indices = @transform_1, window_bounds = array<i64: 24, 128>}, {pipeline_mode = #tpu.pipeline_mode<synchronous>, transform_indices = @transform_2, window_bounds = array<i64: 1, 128>}, {pipeline_mode = #tpu.pipeline_mode<synchronous>, transform_indices = @transform_3, window_bounds = array<i64: 128, 32>}, {pipeline_mode = #tpu.pipeline_mode<synchronous>, transform_indices = @transform_4, window_bounds = array<i64: 1, 32>}, {transform_indices = @transform_5, window_bounds = array<i64: 128, 16>}, {pipeline_mode = #tpu.pipeline_mode<synchronous>, transform_indices = @transform_6, window_bounds = array<i64: 16, 128>}, {pipeline_mode = #tpu.pipeline_mode<synchronous>, transform_indices = @transform_7, window_bounds = array<i64: 1, 128>}, {pipeline_mode = #tpu.pipeline_mode<synchronous>, transform_indices = @transform_8, window_bounds = array<i64: 128, 32>}, {pipeline_mode = #tpu.pipeline_mode<synchronous>, transform_indices = @transform_9, window_bounds = array<i64: 1, 32>}, {pipeline_mode = #tpu.pipeline_mode<synchronous>, transform_indices = @transform_10, window_bounds = array<i64: 32, 32>}, {pipeline_mode = #tpu.pipeline_mode<synchronous>, transform_indices = @transform_11, window_bounds = array<i64: 32, 32>}, {pipeline_mode = #tpu.pipeline_mode<synchronous>, transform_indices = @transform_12, window_bounds = array<i64: 1, 32>}, {pipeline_mode = #tpu.pipeline_mode<synchronous>, transform_indices = @transform_13, window_bounds = array<i64: 1, 32>}, {pipeline_mode = #tpu.pipeline_mode<synchronous>, transform_indices = @transform_14, window_bounds = array<i64: 1, 32>}, {transform_indices = @transform_15, window_bounds = array<i64: 1, 1>}, {transform_indices = @transform_16, window_bounds = array<i64: 8, 128>}]} {
    %c0 = arith.constant 0 : index
    %c0_0 = arith.constant 0 : index
    %0 = vector.load %arg2[%c0, %c0_0] : memref<8x24xf32, #tpu.memory_space<vmem>>, vector<8x24xf32>
    %c0_1 = arith.constant 0 : index
    %c0_2 = arith.constant 0 : index
    %1 = vector.load %arg3[%c0_1, %c0_2] : memref<24x128xf32, #tpu.memory_space<vmem>>, vector<24x128xf32>
    %cst = arith.constant dense<0.000000e+00> : vector<8x128xf32>
    %2 = tpu.matmul %0, %1, %cst {dimension_numbers = #tpu.dot_dimension_numbers<[1], [0], [0], [1], [0, 0, 1, 1], [], []>} : vector<8x24xf32>, vector<24x128xf32>, vector<8x128xf32> -> vector<8x128xf32>
    %c0_3 = arith.constant 0 : index
    %c0_4 = arith.constant 0 : index
    %3 = vector.load %arg4[%c0_3, %c0_4] : memref<1x128xf32, #tpu.memory_space<vmem>>, vector<1x128xf32>
    %4 = vector.broadcast %3 : vector<1x128xf32> to vector<8x128xf32>
    %5 = arith.addf %2, %4 : vector<8x128xf32>
    %cst_5 = arith.constant 0.000000e+00 : f32
    %6 = vector.broadcast %cst_5 : f32 to vector<8x128xf32>
    %7 = arith.maximumf %5, %6 : vector<8x128xf32>
    %c0_6 = arith.constant 0 : index
    %c0_7 = arith.constant 0 : index
    %8 = vector.load %arg5[%c0_6, %c0_7] : memref<128x32xf32, #tpu.memory_space<vmem>>, vector<128x32xf32>
    %cst_8 = arith.constant dense<0.000000e+00> : vector<8x32xf32>
    %9 = tpu.matmul %7, %8, %cst_8 {dimension_numbers = #tpu.dot_dimension_numbers<[1], [0], [0], [1], [0, 0, 1, 1], [], []>} : vector<8x128xf32>, vector<128x32xf32>, vector<8x32xf32> -> vector<8x32xf32>
    %c0_9 = arith.constant 0 : index
    %c0_10 = arith.constant 0 : index
    %10 = vector.load %arg6[%c0_9, %c0_10] : memref<1x32xf32, #tpu.memory_space<vmem>>, vector<1x32xf32>
    %11 = vector.broadcast %10 : vector<1x32xf32> to vector<8x32xf32>
    %12 = arith.addf %9, %11 : vector<8x32xf32>
    %c0_11 = arith.constant 0 : index
    %c0_12 = arith.constant 0 : index
    %13 = vector.load %arg7[%c0_11, %c0_12] : memref<128x16xf32, #tpu.memory_space<vmem>>, vector<128x16xf32>
    %c0_13 = arith.constant 0 : index
    %c0_14 = arith.constant 0 : index
    %14 = vector.load %arg8[%c0_13, %c0_14] : memref<16x128xf32, #tpu.memory_space<vmem>>, vector<16x128xf32>
    %cst_15 = arith.constant dense<0.000000e+00> : vector<128x128xf32>
    %15 = tpu.matmul %13, %14, %cst_15 {dimension_numbers = #tpu.dot_dimension_numbers<[1], [0], [0], [1], [0, 0, 1, 1], [], []>} : vector<128x16xf32>, vector<16x128xf32>, vector<128x128xf32> -> vector<128x128xf32>
    %c0_16 = arith.constant 0 : index
    %c0_17 = arith.constant 0 : index
    %16 = vector.load %arg9[%c0_16, %c0_17] : memref<1x128xf32, #tpu.memory_space<vmem>>, vector<1x128xf32>
    %17 = vector.broadcast %16 : vector<1x128xf32> to vector<128x128xf32>
    %18 = arith.addf %15, %17 : vector<128x128xf32>
    %cst_18 = arith.constant 0.000000e+00 : f32
    %19 = vector.broadcast %cst_18 : f32 to vector<128x128xf32>
    %20 = arith.maximumf %18, %19 : vector<128x128xf32>
    %c0_19 = arith.constant 0 : index
    %c0_20 = arith.constant 0 : index
    %21 = vector.load %arg10[%c0_19, %c0_20] : memref<128x32xf32, #tpu.memory_space<vmem>>, vector<128x32xf32>
    %cst_21 = arith.constant dense<0.000000e+00> : vector<128x32xf32>
    %22 = tpu.matmul %20, %21, %cst_21 {dimension_numbers = #tpu.dot_dimension_numbers<[1], [0], [0], [1], [0, 0, 1, 1], [], []>} : vector<128x128xf32>, vector<128x32xf32>, vector<128x32xf32> -> vector<128x32xf32>
    %c0_22 = arith.constant 0 : index
    %c0_23 = arith.constant 0 : index
    %23 = vector.load %arg11[%c0_22, %c0_23] : memref<1x32xf32, #tpu.memory_space<vmem>>, vector<1x32xf32>
    %24 = vector.broadcast %23 : vector<1x32xf32> to vector<128x32xf32>
    %25 = arith.addf %22, %24 : vector<128x32xf32>
    %c0_24 = arith.constant 0 : index
    %c0_25 = arith.constant 0 : index
    %26 = vector.load %arg12[%c0_24, %c0_25] : memref<32x32xf32, #tpu.memory_space<vmem>>, vector<32x32xf32>
    %cst_26 = arith.constant dense<0.000000e+00> : vector<8x32xf32>
    %27 = tpu.matmul %12, %26, %cst_26 {dimension_numbers = #tpu.dot_dimension_numbers<[1], [0], [0], [1], [0, 0, 1, 1], [], []>} : vector<8x32xf32>, vector<32x32xf32>, vector<8x32xf32> -> vector<8x32xf32>
    %c0_27 = arith.constant 0 : index
    %c0_28 = arith.constant 0 : index
    %28 = vector.load %arg13[%c0_27, %c0_28] : memref<32x32xf32, #tpu.memory_space<vmem>>, vector<32x32xf32>
    %cst_29 = arith.constant dense<0.000000e+00> : vector<128x32xf32>
    %29 = tpu.matmul %25, %28, %cst_29 {dimension_numbers = #tpu.dot_dimension_numbers<[1], [0], [0], [1], [0, 0, 1, 1], [], []>} : vector<128x32xf32>, vector<32x32xf32>, vector<128x32xf32> -> vector<128x32xf32>
    %c0_30 = arith.constant 0 : index
    %c0_31 = arith.constant 0 : index
    %30 = vector.load %arg14[%c0_30, %c0_31] : memref<1x32xf32, #tpu.memory_space<vmem>>, vector<1x32xf32>
    %31 = vector.broadcast %30 : vector<1x32xf32> to vector<128x32xf32>
    %32 = arith.addf %29, %31 : vector<128x32xf32>
    %33 = vector.shape_cast %27 : vector<8x32xf32> to vector<8x1x32xf32>
    %34 = vector.shape_cast %32 : vector<128x32xf32> to vector<1x128x32xf32>
    %35 = vector.broadcast %33 : vector<8x1x32xf32> to vector<8x128x32xf32>
    %36 = vector.broadcast %34 : vector<1x128x32xf32> to vector<8x128x32xf32>
    %37 = arith.addf %35, %36 : vector<8x128x32xf32>
    %cst_32 = arith.constant 0.000000e+00 : f32
    %38 = vector.broadcast %cst_32 : f32 to vector<8x128x32xf32>
    %39 = arith.maximumf %37, %38 : vector<8x128x32xf32>
    %c0_33 = arith.constant 0 : index
    %c0_34 = arith.constant 0 : index
    %40 = vector.load %arg15[%c0_33, %c0_34] : memref<1x32xf32, #tpu.memory_space<vmem>>, vector<1x32xf32>
    %41 = vector.shape_cast %40 : vector<1x32xf32> to vector<1x1x32xf32>
    %42 = vector.broadcast %41 : vector<1x1x32xf32> to vector<8x128x32xf32>
    %43 = arith.mulf %39, %42 : vector<8x128x32xf32>
    %cst_35 = arith.constant dense<0.000000e+00> : vector<8x128xf32>
    %44 = vector.multi_reduction <add>, %43, %cst_35 [2] : vector<8x128x32xf32> to vector<8x128xf32>
    %c0_36 = arith.constant 0 : index
    %c0_37 = arith.constant 0 : index
    %45 = vector.load %arg16[%c0_36, %c0_37] : memref<1x32xf32, #tpu.memory_space<vmem>>, vector<1x32xf32>
    %46 = vector.broadcast %45 : vector<1x32xf32> to vector<8x32xf32>
    %47 = arith.mulf %12, %46 : vector<8x32xf32>
    %cst_38 = arith.constant dense<0.000000e+00> : vector<8x128xf32>
    %48 = tpu.matmul %47, %25, %cst_38 {dimension_numbers = #tpu.dot_dimension_numbers<[1], [1], [0], [0], [0, 0, 1, 0], [], []>} : vector<8x32xf32>, vector<128x32xf32>, vector<8x128xf32> -> vector<8x128xf32>
    %49 = arith.addf %44, %48 : vector<8x128xf32>
    %c0_39 = arith.constant 0 : index
    %c0_40 = arith.constant 0 : index
    %50 = memref.load %arg17[%c0_39, %c0_40] : memref<1x1xf32, #tpu.memory_space<smem>>
    %51 = vector.broadcast %50 : f32 to vector<8x128xf32>
    %52 = arith.addf %49, %51 : vector<8x128xf32>
    %c0_41 = arith.constant 0 : index
    %c0_42 = arith.constant 0 : index
    %53 = vector.load %arg18[%c0_41, %c0_42] : memref<8x128xf32, #tpu.memory_space<vmem>>, vector<8x128xf32>
    tpu.vector_store %arg18[%c0_41, %c0_42], %52 {strides = array<i32>} : memref<8x128xf32, #tpu.memory_space<vmem>>, vector<8x128xf32>,
    return
  }
  func.func @transform_0(%arg0: i32, %arg1: i32) -> (i32, i32) {
    %c0_i32 = arith.constant 0 : i32
    %c0_i32_0 = arith.constant 0 : i32
    return %arg0, %c0_i32 : i32, i32
  }
  func.func @transform_1(%arg0: i32, %arg1: i32) -> (i32, i32) {
    %c0_i32 = arith.constant 0 : i32
    %c0_i32_0 = arith.constant 0 : i32
    %c0_i32_1 = arith.constant 0 : i32
    return %c0_i32, %c0_i32_0 : i32, i32
  }
  func.func @transform_2(%arg0: i32, %arg1: i32) -> (i32, i32) {
    %c0_i32 = arith.constant 0 : i32
    %c0_i32_0 = arith.constant 0 : i32
    %c0_i32_1 = arith.constant 0 : i32
    return %c0_i32, %c0_i32_0 : i32, i32
  }
  func.func @transform_3(%arg0: i32, %arg1: i32) -> (i32, i32) {
    %c0_i32 = arith.constant 0 : i32
    %c0_i32_0 = arith.constant 0 : i32
    %c0_i32_1 = arith.constant 0 : i32
    return %c0_i32, %c0_i32_0 : i32, i32
  }
  func.func @transform_4(%arg0: i32, %arg1: i32) -> (i32, i32) {
    %c0_i32 = arith.constant 0 : i32
    %c0_i32_0 = arith.constant 0 : i32
    %c0_i32_1 = arith.constant 0 : i32
    return %c0_i32, %c0_i32_0 : i32, i32
  }
  func.func @transform_5(%arg0: i32, %arg1: i32) -> (i32, i32) {
    %c0_i32 = arith.constant 0 : i32
    %c0_i32_0 = arith.constant 0 : i32
    return %arg1, %c0_i32 : i32, i32
  }
  func.func @transform_6(%arg0: i32, %arg1: i32) -> (i32, i32) {
    %c0_i32 = arith.constant 0 : i32
    %c0_i32_0 = arith.constant 0 : i32
    %c0_i32_1 = arith.constant 0 : i32
    return %c0_i32, %c0_i32_0 : i32, i32
  }
  func.func @transform_7(%arg0: i32, %arg1: i32) -> (i32, i32) {
    %c0_i32 = arith.constant 0 : i32
    %c0_i32_0 = arith.constant 0 : i32
    %c0_i32_1 = arith.constant 0 : i32
    return %c0_i32, %c0_i32_0 : i32, i32
  }
  func.func @transform_8(%arg0: i32, %arg1: i32) -> (i32, i32) {
    %c0_i32 = arith.constant 0 : i32
    %c0_i32_0 = arith.constant 0 : i32
    %c0_i32_1 = arith.constant 0 : i32
    return %c0_i32, %c0_i32_0 : i32, i32
  }
  func.func @transform_9(%arg0: i32, %arg1: i32) -> (i32, i32) {
    %c0_i32 = arith.constant 0 : i32
    %c0_i32_0 = arith.constant 0 : i32
    %c0_i32_1 = arith.constant 0 : i32
    return %c0_i32, %c0_i32_0 : i32, i32
  }
  func.func @transform_10(%arg0: i32, %arg1: i32) -> (i32, i32) {
    %c0_i32 = arith.constant 0 : i32
    %c0_i32_0 = arith.constant 0 : i32
    %c0_i32_1 = arith.constant 0 : i32
    return %c0_i32, %c0_i32_0 : i32, i32
  }
  func.func @transform_11(%arg0: i32, %arg1: i32) -> (i32, i32) {
    %c0_i32 = arith.constant 0 : i32
    %c0_i32_0 = arith.constant 0 : i32
    %c0_i32_1 = arith.constant 0 : i32
    return %c0_i32, %c0_i32_0 : i32, i32
  }
  func.func @transform_12(%arg0: i32, %arg1: i32) -> (i32, i32) {
    %c0_i32 = arith.constant 0 : i32
    %c0_i32_0 = arith.constant 0 : i32
    %c0_i32_1 = arith.constant 0 : i32
    return %c0_i32, %c0_i32_0 : i32, i32
  }
  func.func @transform_13(%arg0: i32, %arg1: i32) -> (i32, i32) {
    %c0_i32 = arith.constant 0 : i32
    %c0_i32_0 = arith.constant 0 : i32
    %c0_i32_1 = arith.constant 0 : i32
    return %c0_i32, %c0_i32_0 : i32, i32
  }
  func.func @transform_14(%arg0: i32, %arg1: i32) -> (i32, i32) {
    %c0_i32 = arith.constant 0 : i32
    %c0_i32_0 = arith.constant 0 : i32
    %c0_i32_1 = arith.constant 0 : i32
    return %c0_i32, %c0_i32_0 : i32, i32
  }
  func.func @transform_15(%arg0: i32, %arg1: i32) -> (i32, i32) {
    %c0_i32 = arith.constant 0 : i32
    %c0_i32_0 = arith.constant 0 : i32
    %c0_i32_1 = arith.constant 0 : i32
    return %c0_i32, %c0_i32_0 : i32, i32
  }
  func.func @transform_16(%arg0: i32, %arg1: i32) -> (i32, i32) {
    %c0_i32 = arith.constant 0 : i32
    return %arg0, %arg1 : i32, i32
  }
}

</mosaic_0001>

<llo_original>
// kernel: tpu_custom_call.1
$region0: #{tpu_custom_call.1}
  #allocation0 [shape = 'u32[]', space=smem, size = 0x4, offset = 0x4, fixed_abs, tag = 'smem constant byte address 0x4 - core index']
  #allocation1 [shape = 'u32[72,128]{1,0:T(1,128)}', space=vmem, size = 0x9000, scoped, tag = 'internal scratch']
  #allocation2 [shape = 'f32[1,1]{1,0:T(1,128)S(6)}', space=smem, size = 0x200, scoped, tag = 'scoped memory for tpu_custom_call.1']
  %s0 = inlined_call_operand.vmem [shape: f32[8,24], index: 0, kind: input, shape index: {}]
  %s1 = inlined_call_operand.vmem [shape: f32[24,128], index: 1, kind: input, shape index: {}]
  %s2 = inlined_call_operand.vmem [shape: f32[1,128], index: 2, kind: input, shape index: {}]
  %s3 = inlined_call_operand.vmem [shape: f32[128,32], index: 3, kind: input, shape index: {}]
  %s4 = inlined_call_operand.vmem [shape: f32[1,32], index: 4, kind: input, shape index: {}]
  %s5 = inlined_call_operand.vmem [shape: f32[128,16], index: 5, kind: input, shape index: {}]
  %s6 = inlined_call_operand.vmem [shape: f32[16,128], index: 6, kind: input, shape index: {}]
  %s7 = inlined_call_operand.vmem [shape: f32[1,128], index: 7, kind: input, shape index: {}]
  %s8 = inlined_call_operand.vmem [shape: f32[128,32], index: 8, kind: input, shape index: {}]
  %s9 = inlined_call_operand.vmem [shape: f32[1,32], index: 9, kind: input, shape index: {}]
  %s10 = inlined_call_operand.vmem [shape: f32[32,32], index: 10, kind: input, shape index: {}]
  %s11 = inlined_call_operand.vmem [shape: f32[32,32], index: 11, kind: input, shape index: {}]
  %s12 = inlined_call_operand.vmem [shape: f32[1,32], index: 12, kind: input, shape index: {}]
  %s13 = inlined_call_operand.vmem [shape: f32[1,32], index: 13, kind: input, shape index: {}]
  %s14 = inlined_call_operand.vmem [shape: f32[1,32], index: 14, kind: input, shape index: {}]
  %s15 = inlined_call_operand.<no memory space> [shape: f32[1,1], index: 15, kind: input, shape index: {}]
  %s16 = inlined_call_operand.hbm [shape: f32[8,128], index: 16, kind: output, shape index: {}]
  %s17 = sld [smem:[#allocation0]]
  $region74: #{tpu_custom_call.1} parent=0
    _
  %s19 = ssub.s32 1, %s17
  %s20 = scalar_select 0, %s19, %s17
  %21 = sst [smem:[#allocation2]] %s15
  $region1: #{tpu_custom_call.1} parent=0
    #allocation3 [shape = 'u8[4096]{0}', space=vmem, size = 0x1000, scoped, tag = 'output window, operand 0, single buffered']
    #allocation4 [shape = 's32[1]{0}', space=sflag, size = 0x4, scoped, tag = 'scoped memory for tpu_custom_call.1']
    %22 = vsyncpa [#allocation4], 0
    // Predicated region
    $region2: #{tpu_custom_call.1} parent=1 // pred_check
      _
    $region3: #{tpu_custom_call.1} parent=1 // pred_check_branch
      %24 = sbr.rel (0) target = $region5
    $region4: #{tpu_custom_call.1} parent=1 // pred_region
      _
    $region5: #{tpu_custom_call.1} parent=1 // pred_fallthru
      _
    // Predicated region
    $region6: #{tpu_custom_call.1} parent=1 // pred_check
      _
    $region7: #{tpu_custom_call.1} parent=1 // pred_check_branch
      %26 = sbr.rel (0) target = $region9
    $region8: #{tpu_custom_call.1} parent=1 // pred_region
      _
    $region9: #{tpu_custom_call.1} parent=1 // pred_fallthru
      _
    // Predicated region
    $region10: #{tpu_custom_call.1} parent=1 // pred_check
      _
    $region11: #{tpu_custom_call.1} parent=1 // pred_check_branch
      %28 = sbr.rel (0) target = $region13
    $region12: #{tpu_custom_call.1} parent=1 // pred_region
      _
    $region13: #{tpu_custom_call.1} parent=1 // pred_fallthru
      _
    // Predicated region
    $region14: #{tpu_custom_call.1} parent=1 // pred_check
      _
    $region15: #{tpu_custom_call.1} parent=1 // pred_check_branch
      %30 = sbr.rel (0) target = $region17
    $region16: #{tpu_custom_call.1} parent=1 // pred_region
      _
    $region17: #{tpu_custom_call.1} parent=1 // pred_fallthru
      _
    // Predicated region
    $region18: #{tpu_custom_call.1} parent=1 // pred_check
      _
    $region19: #{tpu_custom_call.1} parent=1 // pred_check_branch
      %32 = sbr.rel (0) target = $region21
    $region20: #{tpu_custom_call.1} parent=1 // pred_region
      _
    $region21: #{tpu_custom_call.1} parent=1 // pred_fallthru
      _
    // Predicated region
    $region22: #{tpu_custom_call.1} parent=1 // pred_check
      _
    $region23: #{tpu_custom_call.1} parent=1 // pred_check_branch
      %34 = sbr.rel (0) target = $region25
    $region24: #{tpu_custom_call.1} parent=1 // pred_region
      _
    $region25: #{tpu_custom_call.1} parent=1 // pred_fallthru
      _
    // Predicated region
    $region26: #{tpu_custom_call.1} parent=1 // pred_check
      _
    $region27: #{tpu_custom_call.1} parent=1 // pred_check_branch
      %36 = sbr.rel (0) target = $region29
    $region28: #{tpu_custom_call.1} parent=1 // pred_region
      _
    $region29: #{tpu_custom_call.1} parent=1 // pred_fallthru
      _
    // Predicated region
    $region30: #{tpu_custom_call.1} parent=1 // pred_check
      _
    $region31: #{tpu_custom_call.1} parent=1 // pred_check_branch
      %38 = sbr.rel (0) target = $region33
    $region32: #{tpu_custom_call.1} parent=1 // pred_region
      _
    $region33: #{tpu_custom_call.1} parent=1 // pred_fallthru
      _
    // Predicated region
    $region34: #{tpu_custom_call.1} parent=1 // pred_check
      _
    $region35: #{tpu_custom_call.1} parent=1 // pred_check_branch
      %40 = sbr.rel (0) target = $region37
    $region36: #{tpu_custom_call.1} parent=1 // pred_region
      _
    $region37: #{tpu_custom_call.1} parent=1 // pred_fallthru
      _
    // Predicated region
    $region38: #{tpu_custom_call.1} parent=1 // pred_check
      _
    $region39: #{tpu_custom_call.1} parent=1 // pred_check_branch
      %42 = sbr.rel (0) target = $region41
    $region40: #{tpu_custom_call.1} parent=1 // pred_region
      _
    $region41: #{tpu_custom_call.1} parent=1 // pred_fallthru
      _
    // Predicated region
    $region42: #{tpu_custom_call.1} parent=1 // pred_check
      _
    $region43: #{tpu_custom_call.1} parent=1 // pred_check_branch
      %44 = sbr.rel (0) target = $region45
    $region44: #{tpu_custom_call.1} parent=1 // pred_region
      _
    $region45: #{tpu_custom_call.1} parent=1 // pred_fallthru
      _
    // Predicated region
    $region46: #{tpu_custom_call.1} parent=1 // pred_check
      _
    $region47: #{tpu_custom_call.1} parent=1 // pred_check_branch
      %46 = sbr.rel (0) target = $region49
    $region48: #{tpu_custom_call.1} parent=1 // pred_region
      _
    $region49: #{tpu_custom_call.1} parent=1 // pred_fallthru
      _
    // Predicated region
    $region50: #{tpu_custom_call.1} parent=1 // pred_check
      _
    $region51: #{tpu_custom_call.1} parent=1 // pred_check_branch
      %48 = sbr.rel (0) target = $region53
    $region52: #{tpu_custom_call.1} parent=1 // pred_region
      _
    $region53: #{tpu_custom_call.1} parent=1 // pred_fallthru
      _
    // Predicated region
    $region54: #{tpu_custom_call.1} parent=1 // pred_check
      _
    $region55: #{tpu_custom_call.1} parent=1 // pred_check_branch
      %50 = sbr.rel (0) target = $region57
    $region56: #{tpu_custom_call.1} parent=1 // pred_region
      _
    $region57: #{tpu_custom_call.1} parent=1 // pred_fallthru
      _
    // Predicated region
    $region58: #{tpu_custom_call.1} parent=1 // pred_check
      _
    $region59: #{tpu_custom_call.1} parent=1 // pred_check_branch
      %52 = sbr.rel (0) target = $region61
    $region60: #{tpu_custom_call.1} parent=1 // pred_region
      _
    $region61: #{tpu_custom_call.1} parent=1 // pred_fallthru
      _
    // Predicated region
    $region62: #{tpu_custom_call.1} parent=1 // pred_check
      _
    $region63: #{tpu_custom_call.1} parent=1 // pred_check_branch
      %54 = sbr.rel (0) target = $region65
    $region64: #{tpu_custom_call.1} parent=1 // pred_region
      _
    $region65: #{tpu_custom_call.1} parent=1 // pred_fallthru
      _
    %v55 = vld [vmem:[%s0] sm:$0xff]
    %v56 = vld [vmem:[%s1] sm:$0xff]
    %v57 = vld [vmem:[%s1 + $0x8] sm:$0xff]
    %v58 = vld [vmem:[%s1 + $0x10] sm:$0xff]
    %v59 = vld [vmem:[%s2] sm:$0x1]
    %v61 = vperm.slane %v59, 0
    %vm63 = vcmask 195584
    %v65 = vsel %vm63, %v55, 0
    %67 = vmatpush.msra.mxu0 0.0
    %68 = vmatpush.msra.mxu0 0.0
    %69 = vmatpush.msra.mxu0 0.0
    %70 = vmatpush.msra.mxu0 0.0
    %71 = vmatpush.msra.mxu0 0.0
    %72 = vmatpush.msra.mxu0 0.0
    %73 = vmatpush.msra.mxu0 0.0
    %74 = vmatpush.msra.mxu0 0.0
    %75 = vmatpush.msra.mxu0 0.0
    %76 = vmatpush.msra.mxu0 0.0
    %77 = vmatpush.msra.mxu0 0.0
    %78 = vmatpush.msra.mxu0 0.0
    %79 = vmatpush.msra.mxu0 0.0
    %80 = vmatpush.msra.mxu0 %v58
    %81 = vmatpush.msra.mxu0 %v57
    %82 = vmatpush.msra.mxu0 %v56
    %83 = vmatmul.f32.gmra.mxu0 %v65
    %v84 = vpop.f32.mrf.mxu0
    %v85 = vadd.f32 %v61, %v84
    %86 = vdwg.mxu0
    %v87 = vmax.f32 %v85, 0.0
    %v88 = vld [vmem:[%s3] sm:$0xff]
    %v89 = vld [vmem:[%s3 + $0x8] sm:$0xff]
    %v90 = vld [vmem:[%s3 + $0x10] sm:$0xff]
    %v91 = vld [vmem:[%s3 + $0x18] sm:$0xff]
    %v92 = vld [vmem:[%s3 + $0x20] sm:$0xff]
    %v93 = vld [vmem:[%s3 + $0x28] sm:$0xff]
    %v94 = vld [vmem:[%s3 + $0x30] sm:$0xff]
    %v95 = vld [vmem:[%s3 + $0x38] sm:$0xff]
    %v96 = vld [vmem:[%s3 + $0x40] sm:$0xff]
    %v97 = vld [vmem:[%s3 + $0x48] sm:$0xff]
    %v98 = vld [vmem:[%s3 + $0x50] sm:$0xff]
    %v99 = vld [vmem:[%s3 + $0x58] sm:$0xff]
    %v100 = vld [vmem:[%s3 + $0x60] sm:$0xff]
    %v101 = vld [vmem:[%s3 + $0x68] sm:$0xff]
    %v102 = vld [vmem:[%s3 + $0x70] sm:$0xff]
    %v103 = vld [vmem:[%s3 + $0x78] sm:$0xff]
    %v104 = vld [vmem:[%s4] sm:$0x1]
    %v106 = vperm.slane %v104, 0
    %108 = vmatpush.msra.mxu0 %v103
    %109 = vmatpush.msra.mxu0 %v102
    %110 = vmatpush.msra.mxu0 %v101
    %111 = vmatpush.msra.mxu0 %v100
    %112 = vmatpush.msra.mxu0 %v99
    %113 = vmatpush.msra.mxu0 %v98
    %114 = vmatpush.msra.mxu0 %v97
    %115 = vmatpush.msra.mxu0 %v96
    %116 = vmatpush.msra.mxu0 %v95
    %117 = vmatpush.msra.mxu0 %v94
    %118 = vmatpush.msra.mxu0 %v93
    %119 = vmatpush.msra.mxu0 %v92
    %120 = vmatpush.msra.mxu0 %v91
    %121 = vmatpush.msra.mxu0 %v90
    %122 = vmatpush.msra.mxu0 %v89
    %123 = vmatpush.msra.mxu0 %v88
    %124 = vmatmul.f32.gmra.mxu0 %v87
    %v125 = vpop.f32.mrf.mxu0
    %v126 = vadd.f32 %v106, %v125
    %127 = vdwg.mxu0
    %v128 = vld [vmem:[%s5] sm:$0xff]
    %v129 = vld [vmem:[%s5 + $0x8] sm:$0xff]
    %v130 = vld [vmem:[%s5 + $0x10] sm:$0xff]
    %v131 = vld [vmem:[%s5 + $0x18] sm:$0xff]
    %v132 = vld [vmem:[%s5 + $0x20] sm:$0xff]
    %v133 = vld [vmem:[%s5 + $0x28] sm:$0xff]
    %v134 = vld [vmem:[%s5 + $0x30] sm:$0xff]
    %v135 = vld [vmem:[%s5 + $0x38] sm:$0xff]
    %v136 = vld [vmem:[%s5 + $0x40] sm:$0xff]
    %v137 = vld [vmem:[%s5 + $0x48] sm:$0xff]
    %v138 = vld [vmem:[%s5 + $0x50] sm:$0xff]
    %v139 = vld [vmem:[%s5 + $0x58] sm:$0xff]
    %v140 = vld [vmem:[%s5 + $0x60] sm:$0xff]
    %v141 = vld [vmem:[%s5 + $0x68] sm:$0xff]
    %v142 = vld [vmem:[%s5 + $0x70] sm:$0xff]
    %v143 = vld [vmem:[%s5 + $0x78] sm:$0xff]
    %v144 = vld [vmem:[%s6] sm:$0xff]
    %v145 = vld [vmem:[%s6 + $0x8] sm:$0xff]
    %v146 = vld [vmem:[%s7] sm:$0x1]
    %v148 = vperm.slane %v146, 0
    %vm150 = vcmask 130048
    %v152 = vsel %vm150, %v128, 0
    %v155 = vsel %vm150, %v129, 0
    %v158 = vsel %vm150, %v130, 0
    %v161 = vsel %vm150, %v131, 0
    %v164 = vsel %vm150, %v132, 0
    %v167 = vsel %vm150, %v133, 0
    %v170 = vsel %vm150, %v134, 0
    %v173 = vsel %vm150, %v135, 0
    %v176 = vsel %vm150, %v136, 0
    %v179 = vsel %vm150, %v137, 0
    %v182 = vsel %vm150, %v138, 0
    %v185 = vsel %vm150, %v139, 0
    %v188 = vsel %vm150, %v140, 0
    %v191 = vsel %vm150, %v141, 0
    %v194 = vsel %vm150, %v142, 0
    %v197 = vsel %vm150, %v143, 0
    %199 = vmatpush.msra.mxu0 0.0
    %200 = vmatpush.msra.mxu0 0.0
    %201 = vmatpush.msra.mxu0 0.0
    %202 = vmatpush.msra.mxu0 0.0
    %203 = vmatpush.msra.mxu0 0.0
    %204 = vmatpush.msra.mxu0 0.0
    %205 = vmatpush.msra.mxu0 0.0
    %206 = vmatpush.msra.mxu0 0.0
    %207 = vmatpush.msra.mxu0 0.0
    %208 = vmatpush.msra.mxu0 0.0
    %209 = vmatpush.msra.mxu0 0.0
    %210 = vmatpush.msra.mxu0 0.0
    %211 = vmatpush.msra.mxu0 0.0
    %212 = vmatpush.msra.mxu0 0.0
    %213 = vmatpush.msra.mxu0 %v145
    %214 = vmatpush.msra.mxu0 %v144
    %215 = vmatmul.f32.gmra.mxu0 %v152
    %v216 = vpop.f32.mrf.mxu0
    %v217 = vadd.f32 %v148, %v216
    %218 = vmatmul.f32.gmra.mxu0 %v155
    %v219 = vpop.f32.mrf.mxu0
    %v220 = vadd.f32 %v148, %v219
    %221 = vmatmul.f32.gmra.mxu0 %v158
    %v222 = vpop.f32.mrf.mxu0
    %v223 = vadd.f32 %v148, %v222
    %224 = vmatmul.f32.gmra.mxu0 %v161
    %v225 = vpop.f32.mrf.mxu0
    %v226 = vadd.f32 %v148, %v225
    %227 = vmatmul.f32.gmra.mxu0 %v164
    %v228 = vpop.f32.mrf.mxu0
    %v229 = vadd.f32 %v148, %v228
    %230 = vmatmul.f32.gmra.mxu0 %v167
    %v231 = vpop.f32.mrf.mxu0
    %v232 = vadd.f32 %v148, %v231
    %233 = vmatmul.f32.gmra.mxu0 %v170
    %v234 = vpop.f32.mrf.mxu0
    %v235 = vadd.f32 %v148, %v234
    %236 = vmatmul.f32.gmra.mxu0 %v173
    %v237 = vpop.f32.mrf.mxu0
    %v238 = vadd.f32 %v148, %v237
    %239 = vmatmul.f32.gmra.mxu0 %v176
    %v240 = vpop.f32.mrf.mxu0
    %v241 = vadd.f32 %v148, %v240
    %242 = vmatmul.f32.gmra.mxu0 %v179
    %v243 = vpop.f32.mrf.mxu0
    %v244 = vadd.f32 %v148, %v243
    %245 = vmatmul.f32.gmra.mxu0 %v182
    %v246 = vpop.f32.mrf.mxu0
    %v247 = vadd.f32 %v148, %v246
    %248 = vmatmul.f32.gmra.mxu0 %v185
    %v249 = vpop.f32.mrf.mxu0
    %v250 = vadd.f32 %v148, %v249
    %251 = vmatmul.f32.gmra.mxu0 %v188
    %v252 = vpop.f32.mrf.mxu0
    %v253 = vadd.f32 %v148, %v252
    %254 = vmatmul.f32.gmra.mxu0 %v191
    %v255 = vpop.f32.mrf.mxu0
    %v256 = vadd.f32 %v148, %v255
    %257 = vmatmul.f32.gmra.mxu0 %v194
    %v258 = vpop.f32.mrf.mxu0
    %v259 = vadd.f32 %v148, %v258
    %260 = vmatmul.f32.gmra.mxu0 %v197
    %v261 = vpop.f32.mrf.mxu0
    %v262 = vadd.f32 %v148, %v261
    %263 = vdwg.mxu0
    %v264 = vmax.f32 %v217, 0.0
    %v265 = vmax.f32 %v220, 0.0
    %v266 = vmax.f32 %v223, 0.0
    %v267 = vmax.f32 %v226, 0.0
    %v268 = vmax.f32 %v229, 0.0
    %v269 = vmax.f32 %v232, 0.0
    %v270 = vmax.f32 %v235, 0.0
    %v271 = vmax.f32 %v238, 0.0
    %v272 = vmax.f32 %v241, 0.0
    %v273 = vmax.f32 %v244, 0.0
    %v274 = vmax.f32 %v247, 0.0
    %v275 = vmax.f32 %v250, 0.0
    %v276 = vmax.f32 %v253, 0.0
    %v277 = vmax.f32 %v256, 0.0
    %v278 = vmax.f32 %v259, 0.0
    %v279 = vmax.f32 %v262, 0.0
    %v280 = vld [vmem:[%s8] sm:$0xff]
    %v281 = vld [vmem:[%s8 + $0x8] sm:$0xff]
    %v282 = vld [vmem:[%s8 + $0x10] sm:$0xff]
    %v283 = vld [vmem:[%s8 + $0x18] sm:$0xff]
    %v284 = vld [vmem:[%s8 + $0x20] sm:$0xff]
    %v285 = vld [vmem:[%s8 + $0x28] sm:$0xff]
    %v286 = vld [vmem:[%s8 + $0x30] sm:$0xff]
    %v287 = vld [vmem:[%s8 + $0x38] sm:$0xff]
    %v288 = vld [vmem:[%s8 + $0x40] sm:$0xff]
    %v289 = vld [vmem:[%s8 + $0x48] sm:$0xff]
    %v290 = vld [vmem:[%s8 + $0x50] sm:$0xff]
    %v291 = vld [vmem:[%s8 + $0x58] sm:$0xff]
    %v292 = vld [vmem:[%s8 + $0x60] sm:$0xff]
    %v293 = vld [vmem:[%s8 + $0x68] sm:$0xff]
    %v294 = vld [vmem:[%s8 + $0x70] sm:$0xff]
    %v295 = vld [vmem:[%s8 + $0x78] sm:$0xff]
    %v296 = vld [vmem:[%s9] sm:$0x1]
    %v298 = vperm.slane %v296, 0
    %300 = vmatpush.msra.mxu0 %v295
    %301 = vmatpush.msra.mxu0 %v294
    %302 = vmatpush.msra.mxu0 %v293
    %303 = vmatpush.msra.mxu0 %v292
    %304 = vmatpush.msra.mxu0 %v291
    %305 = vmatpush.msra.mxu0 %v290
    %306 = vmatpush.msra.mxu0 %v289
    %307 = vmatpush.msra.mxu0 %v288
    %308 = vmatpush.msra.mxu0 %v287
    %309 = vmatpush.msra.mxu0 %v286
    %310 = vmatpush.msra.mxu0 %v285
    %311 = vmatpush.msra.mxu0 %v284
    %312 = vmatpush.msra.mxu0 %v283
    %313 = vmatpush.msra.mxu0 %v282
    %314 = vmatpush.msra.mxu0 %v281
    %315 = vmatpush.msra.mxu0 %v280
    %316 = vmatmul.f32.gmra.mxu0 %v264
    %v317 = vpop.f32.mrf.mxu0
    %v318 = vadd.f32 %v298, %v317
    %319 = vmatmul.f32.gmra.mxu0 %v265
    %v320 = vpop.f32.mrf.mxu0
    %v321 = vadd.f32 %v298, %v320
    %322 = vmatmul.f32.gmra.mxu0 %v266
    %v323 = vpop.f32.mrf.mxu0
    %v324 = vadd.f32 %v298, %v323
    %325 = vmatmul.f32.gmra.mxu0 %v267
    %v326 = vpop.f32.mrf.mxu0
    %v327 = vadd.f32 %v298, %v326
    %328 = vmatmul.f32.gmra.mxu0 %v268
    %v329 = vpop.f32.mrf.mxu0
    %v330 = vadd.f32 %v298, %v329
    %331 = vmatmul.f32.gmra.mxu0 %v269
    %v332 = vpop.f32.mrf.mxu0
    %v333 = vadd.f32 %v298, %v332
    %334 = vmatmul.f32.gmra.mxu0 %v270
    %v335 = vpop.f32.mrf.mxu0
    %v336 = vadd.f32 %v298, %v335
    %337 = vmatmul.f32.gmra.mxu0 %v271
    %v338 = vpop.f32.mrf.mxu0
    %v339 = vadd.f32 %v298, %v338
    %340 = vmatmul.f32.gmra.mxu0 %v272
    %v341 = vpop.f32.mrf.mxu0
    %v342 = vadd.f32 %v298, %v341
    %343 = vmatmul.f32.gmra.mxu0 %v273
    %v344 = vpop.f32.mrf.mxu0
    %v345 = vadd.f32 %v298, %v344
    %346 = vmatmul.f32.gmra.mxu0 %v274
    %v347 = vpop.f32.mrf.mxu0
    %v348 = vadd.f32 %v298, %v347
    %349 = vmatmul.f32.gmra.mxu0 %v275
    %v350 = vpop.f32.mrf.mxu0
    %v351 = vadd.f32 %v298, %v350
    %352 = vmatmul.f32.gmra.mxu0 %v276
    %v353 = vpop.f32.mrf.mxu0
    %v354 = vadd.f32 %v298, %v353
    %355 = vmatmul.f32.gmra.mxu0 %v277
    %v356 = vpop.f32.mrf.mxu0
    %v357 = vadd.f32 %v298, %v356
    %358 = vmatmul.f32.gmra.mxu0 %v278
    %v359 = vpop.f32.mrf.mxu0
    %v360 = vadd.f32 %v298, %v359
    %361 = vmatmul.f32.gmra.mxu0 %v279
    %v362 = vpop.f32.mrf.mxu0
    %v363 = vadd.f32 %v298, %v362
    %364 = vdwg.mxu0
    %v365 = vld [vmem:[%s10] sm:$0xff]
    %v366 = vld [vmem:[%s10 + $0x8] sm:$0xff]
    %v367 = vld [vmem:[%s10 + $0x10] sm:$0xff]
    %v368 = vld [vmem:[%s10 + $0x18] sm:$0xff]
    %vm369 = vcmask 261120
    %v371 = vsel %vm369, %v126, 0
    %373 = vmatpush.msra.mxu0 0.0
    %374 = vmatpush.msra.mxu0 0.0
    %375 = vmatpush.msra.mxu0 0.0
    %376 = vmatpush.msra.mxu0 0.0
    %377 = vmatpush.msra.mxu0 0.0
    %378 = vmatpush.msra.mxu0 0.0
    %379 = vmatpush.msra.mxu0 0.0
    %380 = vmatpush.msra.mxu0 0.0
    %381 = vmatpush.msra.mxu0 0.0
    %382 = vmatpush.msra.mxu0 0.0
    %383 = vmatpush.msra.mxu0 0.0
    %384 = vmatpush.msra.mxu0 0.0
    %385 = vmatpush.msra.mxu0 %v368
    %386 = vmatpush.msra.mxu0 %v367
    %387 = vmatpush.msra.mxu0 %v366
    %388 = vmatpush.msra.mxu0 %v365
    %389 = vmatmul.f32.gmra.mxu0 %v371
    %v390 = vpop.f32.mrf.mxu0
    %v391 = vadd.f32 0.0, %v390
    %392 = vdwg.mxu0
    %v393 = vld [vmem:[%s11] sm:$0xff]
    %v394 = vld [vmem:[%s11 + $0x8] sm:$0xff]
    %v395 = vld [vmem:[%s11 + $0x10] sm:$0xff]
    %v396 = vld [vmem:[%s11 + $0x18] sm:$0xff]
    %v397 = vld [vmem:[%s12] sm:$0x1]
    %v399 = vperm.slane %v397, 0
    %v402 = vsel %vm369, %v318, 0
    %v405 = vsel %vm369, %v321, 0
    %v408 = vsel %vm369, %v324, 0
    %v411 = vsel %vm369, %v327, 0
    %v414 = vsel %vm369, %v330, 0
    %v417 = vsel %vm369, %v333, 0
    %v420 = vsel %vm369, %v336, 0
    %v423 = vsel %vm369, %v339, 0
    %v426 = vsel %vm369, %v342, 0
    %v429 = vsel %vm369, %v345, 0
    %v432 = vsel %vm369, %v348, 0
    %v435 = vsel %vm369, %v351, 0
    %v438 = vsel %vm369, %v354, 0
    %v441 = vsel %vm369, %v357, 0
    %v444 = vsel %vm369, %v360, 0
    %v447 = vsel %vm369, %v363, 0
    %449 = vmatpush.msra.mxu0 0.0
    %450 = vmatpush.msra.mxu0 0.0
    %451 = vmatpush.msra.mxu0 0.0
    %452 = vmatpush.msra.mxu0 0.0
    %453 = vmatpush.msra.mxu0 0.0
    %454 = vmatpush.msra.mxu0 0.0
    %455 = vmatpush.msra.mxu0 0.0
    %456 = vmatpush.msra.mxu0 0.0
    %457 = vmatpush.msra.mxu0 0.0
    %458 = vmatpush.msra.mxu0 0.0
    %459 = vmatpush.msra.mxu0 0.0
    %460 = vmatpush.msra.mxu0 0.0
    %461 = vmatpush.msra.mxu0 %v396
    %462 = vmatpush.msra.mxu0 %v395
    %463 = vmatpush.msra.mxu0 %v394
    %464 = vmatpush.msra.mxu0 %v393
    %465 = vmatmul.f32.gmra.mxu0 %v402
    %v466 = vpop.f32.mrf.mxu0
    %v467 = vadd.f32 %v399, %v466
    %468 = vmatmul.f32.gmra.mxu0 %v405
    %v469 = vpop.f32.mrf.mxu0
    %v470 = vadd.f32 %v399, %v469
    %471 = vmatmul.f32.gmra.mxu0 %v408
    %v472 = vpop.f32.mrf.mxu0
    %v473 = vadd.f32 %v399, %v472
    %474 = vmatmul.f32.gmra.mxu0 %v411
    %v475 = vpop.f32.mrf.mxu0
    %v476 = vadd.f32 %v399, %v475
    %477 = vmatmul.f32.gmra.mxu0 %v414
    %v478 = vpop.f32.mrf.mxu0
    %v479 = vadd.f32 %v399, %v478
    %480 = vmatmul.f32.gmra.mxu0 %v417
    %v481 = vpop.f32.mrf.mxu0
    %v482 = vadd.f32 %v399, %v481
    %483 = vmatmul.f32.gmra.mxu0 %v420
    %v484 = vpop.f32.mrf.mxu0
    %v485 = vadd.f32 %v399, %v484
    %486 = vmatmul.f32.gmra.mxu0 %v423
    %v487 = vpop.f32.mrf.mxu0
    %v488 = vadd.f32 %v399, %v487
    %489 = vmatmul.f32.gmra.mxu0 %v426
    %v490 = vpop.f32.mrf.mxu0
    %v491 = vadd.f32 %v399, %v490
    %492 = vmatmul.f32.gmra.mxu0 %v429
    %v493 = vpop.f32.mrf.mxu0
    %v494 = vadd.f32 %v399, %v493
    %495 = vmatmul.f32.gmra.mxu0 %v432
    %v496 = vpop.f32.mrf.mxu0
    %v497 = vadd.f32 %v399, %v496
    %498 = vmatmul.f32.gmra.mxu0 %v435
    %v499 = vpop.f32.mrf.mxu0
    %v500 = vadd.f32 %v399, %v499
    %501 = vmatmul.f32.gmra.mxu0 %v438
    %v502 = vpop.f32.mrf.mxu0
    %v503 = vadd.f32 %v399, %v502
    %504 = vmatmul.f32.gmra.mxu0 %v441
    %v505 = vpop.f32.mrf.mxu0
    %v506 = vadd.f32 %v399, %v505
    %507 = vmatmul.f32.gmra.mxu0 %v444
    %v508 = vpop.f32.mrf.mxu0
    %v509 = vadd.f32 %v399, %v508
    %510 = vmatmul.f32.gmra.mxu0 %v447
    %v511 = vpop.f32.mrf.mxu0
    %v512 = vadd.f32 %v399, %v511
    %513 = vdwg.mxu0
    %v515 = vrot.slane %v391, 1
    %v516 = vrot.slane %v391, 2
    %v517 = vrot.slane %v391, 3
    %v518 = vrot.slane %v391, 4
    %v519 = vrot.slane %v391, 5
    %v520 = vrot.slane %v391, 6
    %v521 = vrot.slane %v391, 7
    %v522 = vperm.slane %v391, 0
    %v523 = vperm.slane %v515, 0
    %v524 = vperm.slane %v516, 0
    %v525 = vperm.slane %v517, 0
    %v526 = vperm.slane %v518, 0
    %v527 = vperm.slane %v519, 0
    %v528 = vperm.slane %v520, 0
    %v529 = vperm.slane %v521, 0
    %v538 = vadd.f32 %v522, %v467
    %v539 = vadd.f32 %v522, %v470
    %v540 = vadd.f32 %v522, %v473
    %v541 = vadd.f32 %v522, %v476
    %v542 = vadd.f32 %v522, %v479
    %v543 = vadd.f32 %v522, %v482
    %v544 = vadd.f32 %v522, %v485
    %v545 = vadd.f32 %v522, %v488
    %v546 = vadd.f32 %v522, %v491
    %v547 = vadd.f32 %v522, %v494
    %v548 = vadd.f32 %v522, %v497
    %v549 = vadd.f32 %v522, %v500
    %v550 = vadd.f32 %v522, %v503
    %v551 = vadd.f32 %v522, %v506
    %v552 = vadd.f32 %v522, %v509
    %v553 = vadd.f32 %v522, %v512
    %v554 = vadd.f32 %v523, %v467
    %v555 = vadd.f32 %v523, %v470
    %v556 = vadd.f32 %v523, %v473
    %v557 = vadd.f32 %v523, %v476
    %v558 = vadd.f32 %v523, %v479
    %v559 = vadd.f32 %v523, %v482
    %v560 = vadd.f32 %v523, %v485
    %v561 = vadd.f32 %v523, %v488
    %v562 = vadd.f32 %v523, %v491
    %v563 = vadd.f32 %v523, %v494
    %v564 = vadd.f32 %v523, %v497
    %v565 = vadd.f32 %v523, %v500
    %v566 = vadd.f32 %v523, %v503
    %v567 = vadd.f32 %v523, %v506
    %v568 = vadd.f32 %v523, %v509
    %v569 = vadd.f32 %v523, %v512
    %v570 = vadd.f32 %v524, %v467
    %v571 = vadd.f32 %v524, %v470
    %v572 = vadd.f32 %v524, %v473
    %v573 = vadd.f32 %v524, %v476
    %v574 = vadd.f32 %v524, %v479
    %v575 = vadd.f32 %v524, %v482
    %v576 = vadd.f32 %v524, %v485
    %v577 = vadd.f32 %v524, %v488
    %v578 = vadd.f32 %v524, %v491
    %v579 = vadd.f32 %v524, %v494
    %v580 = vadd.f32 %v524, %v497
    %v581 = vadd.f32 %v524, %v500
    %v582 = vadd.f32 %v524, %v503
    %v583 = vadd.f32 %v524, %v506
    %v584 = vadd.f32 %v524, %v509
    %v585 = vadd.f32 %v524, %v512
    %v586 = vadd.f32 %v525, %v467
    %v587 = vadd.f32 %v525, %v470
    %v588 = vadd.f32 %v525, %v473
    %v589 = vadd.f32 %v525, %v476
    %v590 = vadd.f32 %v525, %v479
    %v591 = vadd.f32 %v525, %v482
    %v592 = vadd.f32 %v525, %v485
    %v593 = vadd.f32 %v525, %v488
    %v594 = vadd.f32 %v525, %v491
    %v595 = vadd.f32 %v525, %v494
    %v596 = vadd.f32 %v525, %v497
    %v597 = vadd.f32 %v525, %v500
    %v598 = vadd.f32 %v525, %v503
    %v599 = vadd.f32 %v525, %v506
    %v600 = vadd.f32 %v525, %v509
    %v601 = vadd.f32 %v525, %v512
    %v602 = vadd.f32 %v526, %v467
    %v603 = vadd.f32 %v526, %v470
    %v604 = vadd.f32 %v526, %v473
    %v605 = vadd.f32 %v526, %v476
    %v606 = vadd.f32 %v526, %v479
    %v607 = vadd.f32 %v526, %v482
    %v608 = vadd.f32 %v526, %v485
    %v609 = vadd.f32 %v526, %v488
    %v610 = vadd.f32 %v526, %v491
    %v611 = vadd.f32 %v526, %v494
    %v612 = vadd.f32 %v526, %v497
    %v613 = vadd.f32 %v526, %v500
    %v614 = vadd.f32 %v526, %v503
    %v615 = vadd.f32 %v526, %v506
    %v616 = vadd.f32 %v526, %v509
    %v617 = vadd.f32 %v526, %v512
    %v618 = vadd.f32 %v527, %v467
    %v619 = vadd.f32 %v527, %v470
    %v620 = vadd.f32 %v527, %v473
    %v621 = vadd.f32 %v527, %v476
    %v622 = vadd.f32 %v527, %v479
    %v623 = vadd.f32 %v527, %v482
    %v624 = vadd.f32 %v527, %v485
    %v625 = vadd.f32 %v527, %v488
    %v626 = vadd.f32 %v527, %v491
    %v627 = vadd.f32 %v527, %v494
    %v628 = vadd.f32 %v527, %v497
    %v629 = vadd.f32 %v527, %v500
    %v630 = vadd.f32 %v527, %v503
    %v631 = vadd.f32 %v527, %v506
    %v632 = vadd.f32 %v527, %v509
    %v633 = vadd.f32 %v527, %v512
    %v634 = vadd.f32 %v528, %v467
    %v635 = vadd.f32 %v528, %v470
    %v636 = vadd.f32 %v528, %v473
    %v637 = vadd.f32 %v528, %v476
    %v638 = vadd.f32 %v528, %v479
    %v639 = vadd.f32 %v528, %v482
    %v640 = vadd.f32 %v528, %v485
    %v641 = vadd.f32 %v528, %v488
    %v642 = vadd.f32 %v528, %v491
    %v643 = vadd.f32 %v528, %v494
    %v644 = vadd.f32 %v528, %v497
    %v645 = vadd.f32 %v528, %v500
    %v646 = vadd.f32 %v528, %v503
    %v647 = vadd.f32 %v528, %v506
    %v648 = vadd.f32 %v528, %v509
    %v649 = vadd.f32 %v528, %v512
    %v650 = vadd.f32 %v529, %v467
    %v651 = vadd.f32 %v529, %v470
    %v652 = vadd.f32 %v529, %v473
    %v653 = vadd.f32 %v529, %v476
    %v654 = vadd.f32 %v529, %v479
    %v655 = vadd.f32 %v529, %v482
    %v656 = vadd.f32 %v529, %v485
    %v657 = vadd.f32 %v529, %v488
    %v658 = vadd.f32 %v529, %v491
    %v659 = vadd.f32 %v529, %v494
    %v660 = vadd.f32 %v529, %v497
    %v661 = vadd.f32 %v529, %v500
    %v662 = vadd.f32 %v529, %v503
    %v663 = vadd.f32 %v529, %v506
    %v664 = vadd.f32 %v529, %v509
    %v665 = vadd.f32 %v529, %v512
    %v666 = vmax.f32 %v538, 0.0
    %v667 = vmax.f32 %v539, 0.0
    %v668 = vmax.f32 %v540, 0.0
    %v669 = vmax.f32 %v541, 0.0
    %v670 = vmax.f32 %v542, 0.0
    %v671 = vmax.f32 %v543, 0.0
    %v672 = vmax.f32 %v544, 0.0
    %v673 = vmax.f32 %v545, 0.0
    %v674 = vmax.f32 %v546, 0.0
    %v675 = vmax.f32 %v547, 0.0
    %v676 = vmax.f32 %v548, 0.0
    %v677 = vmax.f32 %v549, 0.0
    %v678 = vmax.f32 %v550, 0.0
    %v679 = vmax.f32 %v551, 0.0
    %v680 = vmax.f32 %v552, 0.0
    %v681 = vmax.f32 %v553, 0.0
    %v682 = vmax.f32 %v554, 0.0
    %v683 = vmax.f32 %v555, 0.0
    %v684 = vmax.f32 %v556, 0.0
    %v685 = vmax.f32 %v557, 0.0
    %v686 = vmax.f32 %v558, 0.0
    %v687 = vmax.f32 %v559, 0.0
    %v688 = vmax.f32 %v560, 0.0
    %v689 = vmax.f32 %v561, 0.0
    %v690 = vmax.f32 %v562, 0.0
    %v691 = vmax.f32 %v563, 0.0
    %v692 = vmax.f32 %v564, 0.0
    %v693 = vmax.f32 %v565, 0.0
    %v694 = vmax.f32 %v566, 0.0
    %v695 = vmax.f32 %v567, 0.0
    %v696 = vmax.f32 %v568, 0.0
    %v697 = vmax.f32 %v569, 0.0
    %v698 = vmax.f32 %v570, 0.0
    %v699 = vmax.f32 %v571, 0.0
    %v700 = vmax.f32 %v572, 0.0
    %v701 = vmax.f32 %v573, 0.0
    %v702 = vmax.f32 %v574, 0.0
    %v703 = vmax.f32 %v575, 0.0
    %v704 = vmax.f32 %v576, 0.0
    %v705 = vmax.f32 %v577, 0.0
    %v706 = vmax.f32 %v578, 0.0
    %v707 = vmax.f32 %v579, 0.0
    %v708 = vmax.f32 %v580, 0.0
    %v709 = vmax.f32 %v581, 0.0
    %v710 = vmax.f32 %v582, 0.0
    %v711 = vmax.f32 %v583, 0.0
    %v712 = vmax.f32 %v584, 0.0
    %v713 = vmax.f32 %v585, 0.0
    %v714 = vmax.f32 %v586, 0.0
    %v715 = vmax.f32 %v587, 0.0
    %v716 = vmax.f32 %v588, 0.0
    %v717 = vmax.f32 %v589, 0.0
    %v718 = vmax.f32 %v590, 0.0
    %v719 = vmax.f32 %v591, 0.0
    %v720 = vmax.f32 %v592, 0.0
    %v721 = vmax.f32 %v593, 0.0
    %v722 = vmax.f32 %v594, 0.0
    %v723 = vmax.f32 %v595, 0.0
    %v724 = vmax.f32 %v596, 0.0
    %v725 = vmax.f32 %v597, 0.0
    %v726 = vmax.f32 %v598, 0.0
    %v727 = vmax.f32 %v599, 0.0
    %v728 = vmax.f32 %v600, 0.0
    %v729 = vmax.f32 %v601, 0.0
    %v730 = vmax.f32 %v602, 0.0
    %v731 = vmax.f32 %v603, 0.0
    %v732 = vmax.f32 %v604, 0.0
    %v733 = vmax.f32 %v605, 0.0
    %v734 = vmax.f32 %v606, 0.0
    %v735 = vmax.f32 %v607, 0.0
    %v736 = vmax.f32 %v608, 0.0
    %v737 = vmax.f32 %v609, 0.0
    %v738 = vmax.f32 %v610, 0.0
    %v739 = vmax.f32 %v611, 0.0
    %v740 = vmax.f32 %v612, 0.0
    %v741 = vmax.f32 %v613, 0.0
    %v742 = vmax.f32 %v614, 0.0
    %v743 = vmax.f32 %v615, 0.0
    %v744 = vmax.f32 %v616, 0.0
    %v745 = vmax.f32 %v617, 0.0
    %v746 = vmax.f32 %v618, 0.0
    %v747 = vmax.f32 %v619, 0.0
    %v748 = vmax.f32 %v620, 0.0
    %v749 = vmax.f32 %v621, 0.0
    %v750 = vmax.f32 %v622, 0.0
    %v751 = vmax.f32 %v623, 0.0
    %v752 = vmax.f32 %v624, 0.0
    %v753 = vmax.f32 %v625, 0.0
    %v754 = vmax.f32 %v626, 0.0
    %v755 = vmax.f32 %v627, 0.0
    %v756 = vmax.f32 %v628, 0.0
    %v757 = vmax.f32 %v629, 0.0
    %v758 = vmax.f32 %v630, 0.0
    %v759 = vmax.f32 %v631, 0.0
    %v760 = vmax.f32 %v632, 0.0
    %v761 = vmax.f32 %v633, 0.0
    %v762 = vmax.f32 %v634, 0.0
    %v763 = vmax.f32 %v635, 0.0
    %v764 = vmax.f32 %v636, 0.0
    %v765 = vmax.f32 %v637, 0.0
    %v766 = vmax.f32 %v638, 0.0
    %v767 = vmax.f32 %v639, 0.0
    %v768 = vmax.f32 %v640, 0.0
    %v769 = vmax.f32 %v641, 0.0
    %v770 = vmax.f32 %v642, 0.0
    %v771 = vmax.f32 %v643, 0.0
    %v772 = vmax.f32 %v644, 0.0
    %v773 = vmax.f32 %v645, 0.0
    %v774 = vmax.f32 %v646, 0.0
    %v775 = vmax.f32 %v647, 0.0
    %v776 = vmax.f32 %v648, 0.0
    %v777 = vmax.f32 %v649, 0.0
    %v778 = vmax.f32 %v650, 0.0
    %v779 = vmax.f32 %v651, 0.0
    %v780 = vmax.f32 %v652, 0.0
    %v781 = vmax.f32 %v653, 0.0
    %v782 = vmax.f32 %v654, 0.0
    %v783 = vmax.f32 %v655, 0.0
    %v784 = vmax.f32 %v656, 0.0
    %v785 = vmax.f32 %v657, 0.0
    %v786 = vmax.f32 %v658, 0.0
    %v787 = vmax.f32 %v659, 0.0
    %v788 = vmax.f32 %v660, 0.0
    %v789 = vmax.f32 %v661, 0.0
    %v790 = vmax.f32 %v662, 0.0
    %v791 = vmax.f32 %v663, 0.0
    %v792 = vmax.f32 %v664, 0.0
    %v793 = vmax.f32 %v665, 0.0
    %v794 = vld [vmem:[%s13] sm:$0x1]
    %v796 = vperm.slane %v794, 0
    %v798 = vmul.f32 %v666, %v796
    %v799 = vmul.f32 %v667, %v796
    %v800 = vmul.f32 %v668, %v796
    %v801 = vmul.f32 %v669, %v796
    %v802 = vmul.f32 %v670, %v796
    %v803 = vmul.f32 %v671, %v796
    %v804 = vmul.f32 %v672, %v796
    %v805 = vmul.f32 %v673, %v796
    %v806 = vmul.f32 %v674, %v796
    %v807 = vmul.f32 %v675, %v796
    %v808 = vmul.f32 %v676, %v796
    %v809 = vmul.f32 %v677, %v796
    %v810 = vmul.f32 %v678, %v796
    %v811 = vmul.f32 %v679, %v796
    %v812 = vmul.f32 %v680, %v796
    %v813 = vmul.f32 %v681, %v796
    %v814 = vmul.f32 %v682, %v796
    %v815 = vmul.f32 %v683, %v796
    %v816 = vmul.f32 %v684, %v796
    %v817 = vmul.f32 %v685, %v796
    %v818 = vmul.f32 %v686, %v796
    %v819 = vmul.f32 %v687, %v796
    %v820 = vmul.f32 %v688, %v796
    %v821 = vmul.f32 %v689, %v796
    %v822 = vmul.f32 %v690, %v796
    %v823 = vmul.f32 %v691, %v796
    %v824 = vmul.f32 %v692, %v796
    %v825 = vmul.f32 %v693, %v796
    %v826 = vmul.f32 %v694, %v796
    %v827 = vmul.f32 %v695, %v796
    %v828 = vmul.f32 %v696, %v796
    %v829 = vmul.f32 %v697, %v796
    %v830 = vmul.f32 %v698, %v796
    %v831 = vmul.f32 %v699, %v796
    %v832 = vmul.f32 %v700, %v796
    %v833 = vmul.f32 %v701, %v796
    %v834 = vmul.f32 %v702, %v796
    %v835 = vmul.f32 %v703, %v796
    %v836 = vmul.f32 %v704, %v796
    %v837 = vmul.f32 %v705, %v796
    %v838 = vmul.f32 %v706, %v796
    %v839 = vmul.f32 %v707, %v796
    %v840 = vmul.f32 %v708, %v796
    %v841 = vmul.f32 %v709, %v796
    %v842 = vmul.f32 %v710, %v796
    %v843 = vmul.f32 %v711, %v796
    %v844 = vmul.f32 %v712, %v796
    %v845 = vmul.f32 %v713, %v796
    %v846 = vmul.f32 %v714, %v796
    %v847 = vmul.f32 %v715, %v796
    %v848 = vmul.f32 %v716, %v796
    %v849 = vmul.f32 %v717, %v796
    %v850 = vmul.f32 %v718, %v796
    %v851 = vmul.f32 %v719, %v796
    %v852 = vmul.f32 %v720, %v796
    %v853 = vmul.f32 %v721, %v796
    %v854 = vmul.f32 %v722, %v796
    %v855 = vmul.f32 %v723, %v796
    %v856 = vmul.f32 %v724, %v796
    %v857 = vmul.f32 %v725, %v796
    %v858 = vmul.f32 %v726, %v796
    %v859 = vmul.f32 %v727, %v796
    %v860 = vmul.f32 %v728, %v796
    %v861 = vmul.f32 %v729, %v796
    %v862 = vmul.f32 %v730, %v796
    %v863 = vmul.f32 %v731, %v796
    %v864 = vmul.f32 %v732, %v796
    %v865 = vmul.f32 %v733, %v796
    %v866 = vmul.f32 %v734, %v796
    %v867 = vmul.f32 %v735, %v796
    %v868 = vmul.f32 %v736, %v796
    %v869 = vmul.f32 %v737, %v796
    %v870 = vmul.f32 %v738, %v796
    %v871 = vmul.f32 %v739, %v796
    %v872 = vmul.f32 %v740, %v796
    %v873 = vmul.f32 %v741, %v796
    %v874 = vmul.f32 %v742, %v796
    %v875 = vmul.f32 %v743, %v796
    %v876 = vmul.f32 %v744, %v796
    %v877 = vmul.f32 %v745, %v796
    %v878 = vmul.f32 %v746, %v796
    %v879 = vmul.f32 %v747, %v796
    %v880 = vmul.f32 %v748, %v796
    %v881 = vmul.f32 %v749, %v796
    %v882 = vmul.f32 %v750, %v796
    %v883 = vmul.f32 %v751, %v796
    %v884 = vmul.f32 %v752, %v796
    %v885 = vmul.f32 %v753, %v796
    %v886 = vmul.f32 %v754, %v796
    %v887 = vmul.f32 %v755, %v796
    %v888 = vmul.f32 %v756, %v796
    %v889 = vmul.f32 %v757, %v796
    %v890 = vmul.f32 %v758, %v796
    %v891 = vmul.f32 %v759, %v796
    %v892 = vmul.f32 %v760, %v796
    %v893 = vmul.f32 %v761, %v796
    %v894 = vmul.f32 %v762, %v796
    %v895 = vmul.f32 %v763, %v796
    %v896 = vmul.f32 %v764, %v796
    %v897 = vmul.f32 %v765, %v796
    %v898 = vmul.f32 %v766, %v796
    %v899 = vmul.f32 %v767, %v796
    %v900 = vmul.f32 %v768, %v796
    %v901 = vmul.f32 %v769, %v796
    %v902 = vmul.f32 %v770, %v796
    %v903 = vmul.f32 %v771, %v796
    %v904 = vmul.f32 %v772, %v796
    %v905 = vmul.f32 %v773, %v796
    %v906 = vmul.f32 %v774, %v796
    %v907 = vmul.f32 %v775, %v796
    %v908 = vmul.f32 %v776, %v796
    %v909 = vmul.f32 %v777, %v796
    %v910 = vmul.f32 %v778, %v796
    %v911 = vmul.f32 %v779, %v796
    %v912 = vmul.f32 %v780, %v796
    %v913 = vmul.f32 %v781, %v796
    %v914 = vmul.f32 %v782, %v796
    %v915 = vmul.f32 %v783, %v796
    %v916 = vmul.f32 %v784, %v796
    %v917 = vmul.f32 %v785, %v796
    %v918 = vmul.f32 %v786, %v796
    %v919 = vmul.f32 %v787, %v796
    %v920 = vmul.f32 %v788, %v796
    %v921 = vmul.f32 %v789, %v796
    %v922 = vmul.f32 %v790, %v796
    %v923 = vmul.f32 %v791, %v796
    %v924 = vmul.f32 %v792, %v796
    %v925 = vmul.f32 %v793, %v796
    %v926 = vsel %vm369, %v798, 0.0
    %927 = vadd.xlane.f32.xlu0 %v926
    %v928 = vpop.xlane.xlu0 %927
    %v929 = vsel %vm369, %v799, 0.0
    %930 = vadd.xlane.f32.xlu0 %v929
    %v931 = vpop.xlane.xlu0 %930
    %v932 = vsel %vm369, %v800, 0.0
    %933 = vadd.xlane.f32.xlu0 %v932
    %v934 = vpop.xlane.xlu0 %933
    %v935 = vsel %vm369, %v801, 0.0
    %936 = vadd.xlane.f32.xlu0 %v935
    %v937 = vpop.xlane.xlu0 %936
    %v938 = vsel %vm369, %v802, 0.0
    %939 = vadd.xlane.f32.xlu0 %v938
    %v940 = vpop.xlane.xlu0 %939
    %v941 = vsel %vm369, %v803, 0.0
    %942 = vadd.xlane.f32.xlu0 %v941
    %v943 = vpop.xlane.xlu0 %942
    %v944 = vsel %vm369, %v804, 0.0
    %945 = vadd.xlane.f32.xlu0 %v944
    %v946 = vpop.xlane.xlu0 %945
    %v947 = vsel %vm369, %v805, 0.0
    %948 = vadd.xlane.f32.xlu0 %v947
    %v949 = vpop.xlane.xlu0 %948
    %v950 = vsel %vm369, %v806, 0.0
    %951 = vadd.xlane.f32.xlu0 %v950
    %v952 = vpop.xlane.xlu0 %951
    %v953 = vsel %vm369, %v807, 0.0
    %954 = vadd.xlane.f32.xlu0 %v953
    %v955 = vpop.xlane.xlu0 %954
    %v956 = vsel %vm369, %v808, 0.0
    %957 = vadd.xlane.f32.xlu0 %v956
    %v958 = vpop.xlane.xlu0 %957
    %v959 = vsel %vm369, %v809, 0.0
    %960 = vadd.xlane.f32.xlu0 %v959
    %v961 = vpop.xlane.xlu0 %960
    %v962 = vsel %vm369, %v810, 0.0
    %963 = vadd.xlane.f32.xlu0 %v962
    %v964 = vpop.xlane.xlu0 %963
    %v965 = vsel %vm369, %v811, 0.0
    %966 = vadd.xlane.f32.xlu0 %v965
    %v967 = vpop.xlane.xlu0 %966
    %v968 = vsel %vm369, %v812, 0.0
    %969 = vadd.xlane.f32.xlu0 %v968
    %v970 = vpop.xlane.xlu0 %969
    %v971 = vsel %vm369, %v813, 0.0
    %972 = vadd.xlane.f32.xlu0 %v971
    %v973 = vpop.xlane.xlu0 %972
    %v974 = vsel %vm369, %v814, 0.0
    %975 = vadd.xlane.f32.xlu0 %v974
    %v976 = vpop.xlane.xlu0 %975
    %v977 = vsel %vm369, %v815, 0.0
    %978 = vadd.xlane.f32.xlu0 %v977
    %v979 = vpop.xlane.xlu0 %978
    %v980 = vsel %vm369, %v816, 0.0
    %981 = vadd.xlane.f32.xlu0 %v980
    %v982 = vpop.xlane.xlu0 %981
    %v983 = vsel %vm369, %v817, 0.0
    %984 = vadd.xlane.f32.xlu0 %v983
    %v985 = vpop.xlane.xlu0 %984
    %v986 = vsel %vm369, %v818, 0.0
    %987 = vadd.xlane.f32.xlu0 %v986
    %v988 = vpop.xlane.xlu0 %987
    %v989 = vsel %vm369, %v819, 0.0
    %990 = vadd.xlane.f32.xlu0 %v989
    %v991 = vpop.xlane.xlu0 %990
    %v992 = vsel %vm369, %v820, 0.0
    %993 = vadd.xlane.f32.xlu0 %v992
    %v994 = vpop.xlane.xlu0 %993
    %v995 = vsel %vm369, %v821, 0.0
    %996 = vadd.xlane.f32.xlu0 %v995
    %v997 = vpop.xlane.xlu0 %996
    %v998 = vsel %vm369, %v822, 0.0
    %999 = vadd.xlane.f32.xlu0 %v998
    %v1000 = vpop.xlane.xlu0 %999
    %v1001 = vsel %vm369, %v823, 0.0
    %1002 = vadd.xlane.f32.xlu0 %v1001
    %v1003 = vpop.xlane.xlu0 %1002
    %v1004 = vsel %vm369, %v824, 0.0
    %1005 = vadd.xlane.f32.xlu0 %v1004
    %v1006 = vpop.xlane.xlu0 %1005
    %v1007 = vsel %vm369, %v825, 0.0
    %1008 = vadd.xlane.f32.xlu0 %v1007
    %v1009 = vpop.xlane.xlu0 %1008
    %v1010 = vsel %vm369, %v826, 0.0
    %1011 = vadd.xlane.f32.xlu0 %v1010
    %v1012 = vpop.xlane.xlu0 %1011
    %v1013 = vsel %vm369, %v827, 0.0
    %1014 = vadd.xlane.f32.xlu0 %v1013
    %v1015 = vpop.xlane.xlu0 %1014
    %v1016 = vsel %vm369, %v828, 0.0
    %1017 = vadd.xlane.f32.xlu0 %v1016
    %v1018 = vpop.xlane.xlu0 %1017
    %v1019 = vsel %vm369, %v829, 0.0
    %1020 = vadd.xlane.f32.xlu0 %v1019
    %v1021 = vpop.xlane.xlu0 %1020
    %v1022 = vsel %vm369, %v830, 0.0
    %1023 = vadd.xlane.f32.xlu0 %v1022
    %v1024 = vpop.xlane.xlu0 %1023
    %v1025 = vsel %vm369, %v831, 0.0
    %1026 = vadd.xlane.f32.xlu0 %v1025
    %v1027 = vpop.xlane.xlu0 %1026
    %v1028 = vsel %vm369, %v832, 0.0
    %1029 = vadd.xlane.f32.xlu0 %v1028
    %v1030 = vpop.xlane.xlu0 %1029
    %v1031 = vsel %vm369, %v833, 0.0
    %1032 = vadd.xlane.f32.xlu0 %v1031
    %v1033 = vpop.xlane.xlu0 %1032
    %v1034 = vsel %vm369, %v834, 0.0
    %1035 = vadd.xlane.f32.xlu0 %v1034
    %v1036 = vpop.xlane.xlu0 %1035
    %v1037 = vsel %vm369, %v835, 0.0
    %1038 = vadd.xlane.f32.xlu0 %v1037
    %v1039 = vpop.xlane.xlu0 %1038
    %v1040 = vsel %vm369, %v836, 0.0
    %1041 = vadd.xlane.f32.xlu0 %v1040
    %v1042 = vpop.xlane.xlu0 %1041
    %v1043 = vsel %vm369, %v837, 0.0
    %1044 = vadd.xlane.f32.xlu0 %v1043
    %v1045 = vpop.xlane.xlu0 %1044
    %v1046 = vsel %vm369, %v838, 0.0
    %1047 = vadd.xlane.f32.xlu0 %v1046
    %v1048 = vpop.xlane.xlu0 %1047
    %v1049 = vsel %vm369, %v839, 0.0
    %1050 = vadd.xlane.f32.xlu0 %v1049
    %v1051 = vpop.xlane.xlu0 %1050
    %v1052 = vsel %vm369, %v840, 0.0
    %1053 = vadd.xlane.f32.xlu0 %v1052
    %v1054 = vpop.xlane.xlu0 %1053
    %v1055 = vsel %vm369, %v841, 0.0
    %1056 = vadd.xlane.f32.xlu0 %v1055
    %v1057 = vpop.xlane.xlu0 %1056
    %v1058 = vsel %vm369, %v842, 0.0
    %1059 = vadd.xlane.f32.xlu0 %v1058
    %v1060 = vpop.xlane.xlu0 %1059
    %v1061 = vsel %vm369, %v843, 0.0
    %1062 = vadd.xlane.f32.xlu0 %v1061
    %v1063 = vpop.xlane.xlu0 %1062
    %v1064 = vsel %vm369, %v844, 0.0
    %1065 = vadd.xlane.f32.xlu0 %v1064
    %v1066 = vpop.xlane.xlu0 %1065
    %v1067 = vsel %vm369, %v845, 0.0
    %1068 = vadd.xlane.f32.xlu0 %v1067
    %v1069 = vpop.xlane.xlu0 %1068
    %v1070 = vsel %vm369, %v846, 0.0
    %1071 = vadd.xlane.f32.xlu0 %v1070
    %v1072 = vpop.xlane.xlu0 %1071
    %v1073 = vsel %vm369, %v847, 0.0
    %1074 = vadd.xlane.f32.xlu0 %v1073
    %v1075 = vpop.xlane.xlu0 %1074
    %v1076 = vsel %vm369, %v848, 0.0
    %1077 = vadd.xlane.f32.xlu0 %v1076
    %v1078 = vpop.xlane.xlu0 %1077
    %v1079 = vsel %vm369, %v849, 0.0
    %1080 = vadd.xlane.f32.xlu0 %v1079
    %v1081 = vpop.xlane.xlu0 %1080
    %v1082 = vsel %vm369, %v850, 0.0
    %1083 = vadd.xlane.f32.xlu0 %v1082
    %v1084 = vpop.xlane.xlu0 %1083
    %v1085 = vsel %vm369, %v851, 0.0
    %1086 = vadd.xlane.f32.xlu0 %v1085
    %v1087 = vpop.xlane.xlu0 %1086
    %v1088 = vsel %vm369, %v852, 0.0
    %1089 = vadd.xlane.f32.xlu0 %v1088
    %v1090 = vpop.xlane.xlu0 %1089
    %v1091 = vsel %vm369, %v853, 0.0
    %1092 = vadd.xlane.f32.xlu0 %v1091
    %v1093 = vpop.xlane.xlu0 %1092
    %v1094 = vsel %vm369, %v854, 0.0
    %1095 = vadd.xlane.f32.xlu0 %v1094
    %v1096 = vpop.xlane.xlu0 %1095
    %v1097 = vsel %vm369, %v855, 0.0
    %1098 = vadd.xlane.f32.xlu0 %v1097
    %v1099 = vpop.xlane.xlu0 %1098
    %v1100 = vsel %vm369, %v856, 0.0
    %1101 = vadd.xlane.f32.xlu0 %v1100
    %v1102 = vpop.xlane.xlu0 %1101
    %v1103 = vsel %vm369, %v857, 0.0
    %1104 = vadd.xlane.f32.xlu0 %v1103
    %v1105 = vpop.xlane.xlu0 %1104
    %v1106 = vsel %vm369, %v858, 0.0
    %1107 = vadd.xlane.f32.xlu0 %v1106
    %v1108 = vpop.xlane.xlu0 %1107
    %v1109 = vsel %vm369, %v859, 0.0
    %1110 = vadd.xlane.f32.xlu0 %v1109
    %v1111 = vpop.xlane.xlu0 %1110
    %v1112 = vsel %vm369, %v860, 0.0
    %1113 = vadd.xlane.f32.xlu0 %v1112
    %v1114 = vpop.xlane.xlu0 %1113
    %v1115 = vsel %vm369, %v861, 0.0
    %1116 = vadd.xlane.f32.xlu0 %v1115
    %v1117 = vpop.xlane.xlu0 %1116
    %v1118 = vsel %vm369, %v862, 0.0
    %1119 = vadd.xlane.f32.xlu0 %v1118
    %v1120 = vpop.xlane.xlu0 %1119
    %v1121 = vsel %vm369, %v863, 0.0
    %1122 = vadd.xlane.f32.xlu0 %v1121
    %v1123 = vpop.xlane.xlu0 %1122
    %v1124 = vsel %vm369, %v864, 0.0
    %1125 = vadd.xlane.f32.xlu0 %v1124
    %v1126 = vpop.xlane.xlu0 %1125
    %v1127 = vsel %vm369, %v865, 0.0
    %1128 = vadd.xlane.f32.xlu0 %v1127
    %v1129 = vpop.xlane.xlu0 %1128
    %v1130 = vsel %vm369, %v866, 0.0
    %1131 = vadd.xlane.f32.xlu0 %v1130
    %v1132 = vpop.xlane.xlu0 %1131
    %v1133 = vsel %vm369, %v867, 0.0
    %1134 = vadd.xlane.f32.xlu0 %v1133
    %v1135 = vpop.xlane.xlu0 %1134
    %v1136 = vsel %vm369, %v868, 0.0
    %1137 = vadd.xlane.f32.xlu0 %v1136
    %v1138 = vpop.xlane.xlu0 %1137
    %v1139 = vsel %vm369, %v869, 0.0
    %1140 = vadd.xlane.f32.xlu0 %v1139
    %v1141 = vpop.xlane.xlu0 %1140
    %v1142 = vsel %vm369, %v870, 0.0
    %1143 = vadd.xlane.f32.xlu0 %v1142
    %v1144 = vpop.xlane.xlu0 %1143
    %v1145 = vsel %vm369, %v871, 0.0
    %1146 = vadd.xlane.f32.xlu0 %v1145
    %v1147 = vpop.xlane.xlu0 %1146
    %v1148 = vsel %vm369, %v872, 0.0
    %1149 = vadd.xlane.f32.xlu0 %v1148
    %v1150 = vpop.xlane.xlu0 %1149
    %v1151 = vsel %vm369, %v873, 0.0
    %1152 = vadd.xlane.f32.xlu0 %v1151
    %v1153 = vpop.xlane.xlu0 %1152
    %v1154 = vsel %vm369, %v874, 0.0
    %1155 = vadd.xlane.f32.xlu0 %v1154
    %v1156 = vpop.xlane.xlu0 %1155
    %v1157 = vsel %vm369, %v875, 0.0
    %1158 = vadd.xlane.f32.xlu0 %v1157
    %v1159 = vpop.xlane.xlu0 %1158
    %v1160 = vsel %vm369, %v876, 0.0
    %1161 = vadd.xlane.f32.xlu0 %v1160
    %v1162 = vpop.xlane.xlu0 %1161
    %v1163 = vsel %vm369, %v877, 0.0
    %1164 = vadd.xlane.f32.xlu0 %v1163
    %v1165 = vpop.xlane.xlu0 %1164
    %v1166 = vsel %vm369, %v878, 0.0
    %1167 = vadd.xlane.f32.xlu0 %v1166
    %v1168 = vpop.xlane.xlu0 %1167
    %v1169 = vsel %vm369, %v879, 0.0
    %1170 = vadd.xlane.f32.xlu0 %v1169
    %v1171 = vpop.xlane.xlu0 %1170
    %v1172 = vsel %vm369, %v880, 0.0
    %1173 = vadd.xlane.f32.xlu0 %v1172
    %v1174 = vpop.xlane.xlu0 %1173
    %v1175 = vsel %vm369, %v881, 0.0
    %1176 = vadd.xlane.f32.xlu0 %v1175
    %v1177 = vpop.xlane.xlu0 %1176
    %v1178 = vsel %vm369, %v882, 0.0
    %1179 = vadd.xlane.f32.xlu0 %v1178
    %v1180 = vpop.xlane.xlu0 %1179
    %v1181 = vsel %vm369, %v883, 0.0
    %1182 = vadd.xlane.f32.xlu0 %v1181
    %v1183 = vpop.xlane.xlu0 %1182
    %v1184 = vsel %vm369, %v884, 0.0
    %1185 = vadd.xlane.f32.xlu0 %v1184
    %v1186 = vpop.xlane.xlu0 %1185
    %v1187 = vsel %vm369, %v885, 0.0
    %1188 = vadd.xlane.f32.xlu0 %v1187
    %v1189 = vpop.xlane.xlu0 %1188
    %v1190 = vsel %vm369, %v886, 0.0
    %1191 = vadd.xlane.f32.xlu0 %v1190
    %v1192 = vpop.xlane.xlu0 %1191
    %v1193 = vsel %vm369, %v887, 0.0
    %1194 = vadd.xlane.f32.xlu0 %v1193
    %v1195 = vpop.xlane.xlu0 %1194
    %v1196 = vsel %vm369, %v888, 0.0
    %1197 = vadd.xlane.f32.xlu0 %v1196
    %v1198 = vpop.xlane.xlu0 %1197
    %v1199 = vsel %vm369, %v889, 0.0
    %1200 = vadd.xlane.f32.xlu0 %v1199
    %v1201 = vpop.xlane.xlu0 %1200
    %v1202 = vsel %vm369, %v890, 0.0
    %1203 = vadd.xlane.f32.xlu0 %v1202
    %v1204 = vpop.xlane.xlu0 %1203
    %v1205 = vsel %vm369, %v891, 0.0
    %1206 = vadd.xlane.f32.xlu0 %v1205
    %v1207 = vpop.xlane.xlu0 %1206
    %v1208 = vsel %vm369, %v892, 0.0
    %1209 = vadd.xlane.f32.xlu0 %v1208
    %v1210 = vpop.xlane.xlu0 %1209
    %v1211 = vsel %vm369, %v893, 0.0
    %1212 = vadd.xlane.f32.xlu0 %v1211
    %v1213 = vpop.xlane.xlu0 %1212
    %v1214 = vsel %vm369, %v894, 0.0
    %1215 = vadd.xlane.f32.xlu0 %v1214
    %v1216 = vpop.xlane.xlu0 %1215
    %v1217 = vsel %vm369, %v895, 0.0
    %1218 = vadd.xlane.f32.xlu0 %v1217
    %v1219 = vpop.xlane.xlu0 %1218
    %v1220 = vsel %vm369, %v896, 0.0
    %1221 = vadd.xlane.f32.xlu0 %v1220
    %v1222 = vpop.xlane.xlu0 %1221
    %v1223 = vsel %vm369, %v897, 0.0
    %1224 = vadd.xlane.f32.xlu0 %v1223
    %v1225 = vpop.xlane.xlu0 %1224
    %v1226 = vsel %vm369, %v898, 0.0
    %1227 = vadd.xlane.f32.xlu0 %v1226
    %v1228 = vpop.xlane.xlu0 %1227
    %v1229 = vsel %vm369, %v899, 0.0
    %1230 = vadd.xlane.f32.xlu0 %v1229
    %v1231 = vpop.xlane.xlu0 %1230
    %v1232 = vsel %vm369, %v900, 0.0
    %1233 = vadd.xlane.f32.xlu0 %v1232
    %v1234 = vpop.xlane.xlu0 %1233
    %v1235 = vsel %vm369, %v901, 0.0
    %1236 = vadd.xlane.f32.xlu0 %v1235
    %v1237 = vpop.xlane.xlu0 %1236
    %v1238 = vsel %vm369, %v902, 0.0
    %1239 = vadd.xlane.f32.xlu0 %v1238
    %v1240 = vpop.xlane.xlu0 %1239
    %v1241 = vsel %vm369, %v903, 0.0
    %1242 = vadd.xlane.f32.xlu0 %v1241
    %v1243 = vpop.xlane.xlu0 %1242
    %v1244 = vsel %vm369, %v904, 0.0
    %1245 = vadd.xlane.f32.xlu0 %v1244
    %v1246 = vpop.xlane.xlu0 %1245
    %v1247 = vsel %vm369, %v905, 0.0
    %1248 = vadd.xlane.f32.xlu0 %v1247
    %v1249 = vpop.xlane.xlu0 %1248
    %v1250 = vsel %vm369, %v906, 0.0
    %1251 = vadd.xlane.f32.xlu0 %v1250
    %v1252 = vpop.xlane.xlu0 %1251
    %v1253 = vsel %vm369, %v907, 0.0
    %1254 = vadd.xlane.f32.xlu0 %v1253
    %v1255 = vpop.xlane.xlu0 %1254
    %v1256 = vsel %vm369, %v908, 0.0
    %1257 = vadd.xlane.f32.xlu0 %v1256
    %v1258 = vpop.xlane.xlu0 %1257
    %v1259 = vsel %vm369, %v909, 0.0
    %1260 = vadd.xlane.f32.xlu0 %v1259
    %v1261 = vpop.xlane.xlu0 %1260
    %v1262 = vsel %vm369, %v910, 0.0
    %1263 = vadd.xlane.f32.xlu0 %v1262
    %v1264 = vpop.xlane.xlu0 %1263
    %v1265 = vsel %vm369, %v911, 0.0
    %1266 = vadd.xlane.f32.xlu0 %v1265
    %v1267 = vpop.xlane.xlu0 %1266
    %v1268 = vsel %vm369, %v912, 0.0
    %1269 = vadd.xlane.f32.xlu0 %v1268
    %v1270 = vpop.xlane.xlu0 %1269
    %v1271 = vsel %vm369, %v913, 0.0
    %1272 = vadd.xlane.f32.xlu0 %v1271
    %v1273 = vpop.xlane.xlu0 %1272
    %v1274 = vsel %vm369, %v914, 0.0
    %1275 = vadd.xlane.f32.xlu0 %v1274
    %v1276 = vpop.xlane.xlu0 %1275
    %v1277 = vsel %vm369, %v915, 0.0
    %1278 = vadd.xlane.f32.xlu0 %v1277
    %v1279 = vpop.xlane.xlu0 %1278
    %v1280 = vsel %vm369, %v916, 0.0
    %1281 = vadd.xlane.f32.xlu0 %v1280
    %v1282 = vpop.xlane.xlu0 %1281
    %v1283 = vsel %vm369, %v917, 0.0
    %1284 = vadd.xlane.f32.xlu0 %v1283
    %v1285 = vpop.xlane.xlu0 %1284
    %v1286 = vsel %vm369, %v918, 0.0
    %1287 = vadd.xlane.f32.xlu0 %v1286
    %v1288 = vpop.xlane.xlu0 %1287
    %v1289 = vsel %vm369, %v919, 0.0
    %1290 = vadd.xlane.f32.xlu0 %v1289
    %v1291 = vpop.xlane.xlu0 %1290
    %v1292 = vsel %vm369, %v920, 0.0
    %1293 = vadd.xlane.f32.xlu0 %v1292
    %v1294 = vpop.xlane.xlu0 %1293
    %v1295 = vsel %vm369, %v921, 0.0
    %1296 = vadd.xlane.f32.xlu0 %v1295
    %v1297 = vpop.xlane.xlu0 %1296
    %v1298 = vsel %vm369, %v922, 0.0
    %1299 = vadd.xlane.f32.xlu0 %v1298
    %v1300 = vpop.xlane.xlu0 %1299
    %v1301 = vsel %vm369, %v923, 0.0
    %1302 = vadd.xlane.f32.xlu0 %v1301
    %v1303 = vpop.xlane.xlu0 %1302
    %v1304 = vsel %vm369, %v924, 0.0
    %1305 = vadd.xlane.f32.xlu0 %v1304
    %v1306 = vpop.xlane.xlu0 %1305
    %v1307 = vsel %vm369, %v925, 0.0
    %1308 = vadd.xlane.f32.xlu0 %v1307
    %v1309 = vpop.xlane.xlu0 %1308
    %v1310 = vld [vmem:[%s14] sm:$0x1]
    %v1312 = vperm.slane %v1310, 0
    %v1314 = vmul.f32 %v126, %v1312
    %v1316 = vsel %vm369, %v1314, 0
    %1318 = vmatpush.xpose.msra.mxu0 %v447
    %1319 = vmatpush.xpose.msra.mxu0 %v444
    %1320 = vmatpush.xpose.msra.mxu0 %v441
    %1321 = vmatpush.xpose.msra.mxu0 %v438
    %1322 = vmatpush.xpose.msra.mxu0 %v435
    %1323 = vmatpush.xpose.msra.mxu0 %v432
    %1324 = vmatpush.xpose.msra.mxu0 %v429
    %1325 = vmatpush.xpose.msra.mxu0 %v426
    %1326 = vmatpush.xpose.msra.mxu0 %v423
    %1327 = vmatpush.xpose.msra.mxu0 %v420
    %1328 = vmatpush.xpose.msra.mxu0 %v417
    %1329 = vmatpush.xpose.msra.mxu0 %v414
    %1330 = vmatpush.xpose.msra.mxu0 %v411
    %1331 = vmatpush.xpose.msra.mxu0 %v408
    %1332 = vmatpush.xpose.msra.mxu0 %v405
    %1333 = vmatpush.xpose.msra.mxu0 %v402
    %1334 = vmatmul.f32.gmra.mxu0 %v1316
    %v1335 = vpop.f32.mrf.mxu0
    %v1336 = vadd.f32 0.0, %v1335
    %1337 = vdwg.mxu0
    %v1339 = vperm.slane %v1336, 0
    %v1340 = vlaneseq
    %v1341 = vshrl.u32 %v1340, 7
    %1343 = vset.pattern.permute.xlu0 %v1341
    %1344 = vperm.xlu0 %1343, %v1339
    %v1345 = vpop.permute.xlu0 %1344
    %v1346 = vlaneseq
    %v1347 = vshrl.u32 %v1346, 7
    %v1348 = vadd.s32 %v1347, 8
    %1349 = vset.pattern.permute.xlu0 %v1348
    %1350 = vperm.xlu0 %1349, %v1339
    %v1351 = vpop.permute.xlu0 %1350
    %v1352 = vlaneseq
    %v1353 = vshrl.u32 %v1352, 7
    %v1354 = vadd.s32 %v1353, 16
    %1355 = vset.pattern.permute.xlu0 %v1354
    %1356 = vperm.xlu0 %1355, %v1339
    %v1357 = vpop.permute.xlu0 %1356
    %v1358 = vlaneseq
    %v1359 = vshrl.u32 %v1358, 7
    %v1360 = vadd.s32 %v1359, 24
    %1361 = vset.pattern.permute.xlu0 %v1360
    %1362 = vperm.xlu0 %1361, %v1339
    %v1363 = vpop.permute.xlu0 %1362
    %v1364 = vlaneseq
    %v1365 = vshrl.u32 %v1364, 7
    %v1366 = vadd.s32 %v1365, 32
    %1367 = vset.pattern.permute.xlu0 %v1366
    %1368 = vperm.xlu0 %1367, %v1339
    %v1369 = vpop.permute.xlu0 %1368
    %v1370 = vlaneseq
    %v1371 = vshrl.u32 %v1370, 7
    %v1372 = vadd.s32 %v1371, 40
    %1373 = vset.pattern.permute.xlu0 %v1372
    %1374 = vperm.xlu0 %1373, %v1339
    %v1375 = vpop.permute.xlu0 %1374
    %v1376 = vlaneseq
    %v1377 = vshrl.u32 %v1376, 7
    %v1378 = vadd.s32 %v1377, 48
    %1379 = vset.pattern.permute.xlu0 %v1378
    %1380 = vperm.xlu0 %1379, %v1339
    %v1381 = vpop.permute.xlu0 %1380
    %v1382 = vlaneseq
    %v1383 = vshrl.u32 %v1382, 7
    %v1384 = vadd.s32 %v1383, 56
    %1385 = vset.pattern.permute.xlu0 %v1384
    %1386 = vperm.xlu0 %1385, %v1339
    %v1387 = vpop.permute.xlu0 %1386
    %v1388 = vlaneseq
    %v1389 = vshrl.u32 %v1388, 7
    %v1390 = vadd.s32 %v1389, 64
    %1391 = vset.pattern.permute.xlu0 %v1390
    %1392 = vperm.xlu0 %1391, %v1339
    %v1393 = vpop.permute.xlu0 %1392
    %v1394 = vlaneseq
    %v1395 = vshrl.u32 %v1394, 7
    %v1396 = vadd.s32 %v1395, 72
    %1397 = vset.pattern.permute.xlu0 %v1396
    %1398 = vperm.xlu0 %1397, %v1339
    %v1399 = vpop.permute.xlu0 %1398
    %v1400 = vlaneseq
    %v1401 = vshrl.u32 %v1400, 7
    %v1402 = vadd.s32 %v1401, 80
    %1403 = vset.pattern.permute.xlu0 %v1402
    %1404 = vperm.xlu0 %1403, %v1339
    %v1405 = vpop.permute.xlu0 %1404
    %v1406 = vlaneseq
    %v1407 = vshrl.u32 %v1406, 7
    %v1408 = vadd.s32 %v1407, 88
    %1409 = vset.pattern.permute.xlu0 %v1408
    %1410 = vperm.xlu0 %1409, %v1339
    %v1411 = vpop.permute.xlu0 %1410
    %v1412 = vlaneseq
    %v1413 = vshrl.u32 %v1412, 7
    %v1414 = vadd.s32 %v1413, 96
    %1415 = vset.pattern.permute.xlu0 %v1414
    %1416 = vperm.xlu0 %1415, %v1339
    %v1417 = vpop.permute.xlu0 %1416
    %v1418 = vlaneseq
    %v1419 = vshrl.u32 %v1418, 7
    %v1420 = vadd.s32 %v1419, 104
    %1421 = vset.pattern.permute.xlu0 %v1420
    %1422 = vperm.xlu0 %1421, %v1339
    %v1423 = vpop.permute.xlu0 %1422
    %v1424 = vlaneseq
    %v1425 = vshrl.u32 %v1424, 7
    %v1426 = vadd.s32 %v1425, 112
    %1427 = vset.pattern.permute.xlu0 %v1426
    %1428 = vperm.xlu0 %1427, %v1339
    %v1429 = vpop.permute.xlu0 %1428
    %v1430 = vlaneseq
    %v1431 = vshrl.u32 %v1430, 7
    %v1432 = vadd.s32 %v1431, 120
    %1433 = vset.pattern.permute.xlu0 %v1432
    %1434 = vperm.xlu0 %1433, %v1339
    %v1435 = vpop.permute.xlu0 %1434
    %v1436 = vperm.slane %v1336, 1
    %v1437 = vlaneseq
    %v1438 = vshrl.u32 %v1437, 7
    %1440 = vset.pattern.permute.xlu0 %v1438
    %1441 = vperm.xlu0 %1440, %v1436
    %v1442 = vpop.permute.xlu0 %1441
    %v1443 = vlaneseq
    %v1444 = vshrl.u32 %v1443, 7
    %v1445 = vadd.s32 %v1444, 8
    %1446 = vset.pattern.permute.xlu0 %v1445
    %1447 = vperm.xlu0 %1446, %v1436
    %v1448 = vpop.permute.xlu0 %1447
    %v1449 = vlaneseq
    %v1450 = vshrl.u32 %v1449, 7
    %v1451 = vadd.s32 %v1450, 16
    %1452 = vset.pattern.permute.xlu0 %v1451
    %1453 = vperm.xlu0 %1452, %v1436
    %v1454 = vpop.permute.xlu0 %1453
    %v1455 = vlaneseq
    %v1456 = vshrl.u32 %v1455, 7
    %v1457 = vadd.s32 %v1456, 24
    %1458 = vset.pattern.permute.xlu0 %v1457
    %1459 = vperm.xlu0 %1458, %v1436
    %v1460 = vpop.permute.xlu0 %1459
    %v1461 = vlaneseq
    %v1462 = vshrl.u32 %v1461, 7
    %v1463 = vadd.s32 %v1462, 32
    %1464 = vset.pattern.permute.xlu0 %v1463
    %1465 = vperm.xlu0 %1464, %v1436
    %v1466 = vpop.permute.xlu0 %1465
    %v1467 = vlaneseq
    %v1468 = vshrl.u32 %v1467, 7
    %v1469 = vadd.s32 %v1468, 40
    %1470 = vset.pattern.permute.xlu0 %v1469
    %1471 = vperm.xlu0 %1470, %v1436
    %v1472 = vpop.permute.xlu0 %1471
    %v1473 = vlaneseq
    %v1474 = vshrl.u32 %v1473, 7
    %v1475 = vadd.s32 %v1474, 48
    %1476 = vset.pattern.permute.xlu0 %v1475
    %1477 = vperm.xlu0 %1476, %v1436
    %v1478 = vpop.permute.xlu0 %1477
    %v1479 = vlaneseq
    %v1480 = vshrl.u32 %v1479, 7
    %v1481 = vadd.s32 %v1480, 56
    %1482 = vset.pattern.permute.xlu0 %v1481
    %1483 = vperm.xlu0 %1482, %v1436
    %v1484 = vpop.permute.xlu0 %1483
    %v1485 = vlaneseq
    %v1486 = vshrl.u32 %v1485, 7
    %v1487 = vadd.s32 %v1486, 64
    %1488 = vset.pattern.permute.xlu0 %v1487
    %1489 = vperm.xlu0 %1488, %v1436
    %v1490 = vpop.permute.xlu0 %1489
    %v1491 = vlaneseq
    %v1492 = vshrl.u32 %v1491, 7
    %v1493 = vadd.s32 %v1492, 72
    %1494 = vset.pattern.permute.xlu0 %v1493
    %1495 = vperm.xlu0 %1494, %v1436
    %v1496 = vpop.permute.xlu0 %1495
    %v1497 = vlaneseq
    %v1498 = vshrl.u32 %v1497, 7
    %v1499 = vadd.s32 %v1498, 80
    %1500 = vset.pattern.permute.xlu0 %v1499
    %1501 = vperm.xlu0 %1500, %v1436
    %v1502 = vpop.permute.xlu0 %1501
    %v1503 = vlaneseq
    %v1504 = vshrl.u32 %v1503, 7
    %v1505 = vadd.s32 %v1504, 88
    %1506 = vset.pattern.permute.xlu0 %v1505
    %1507 = vperm.xlu0 %1506, %v1436
    %v1508 = vpop.permute.xlu0 %1507
    %v1509 = vlaneseq
    %v1510 = vshrl.u32 %v1509, 7
    %v1511 = vadd.s32 %v1510, 96
    %1512 = vset.pattern.permute.xlu0 %v1511
    %1513 = vperm.xlu0 %1512, %v1436
    %v1514 = vpop.permute.xlu0 %1513
    %v1515 = vlaneseq
    %v1516 = vshrl.u32 %v1515, 7
    %v1517 = vadd.s32 %v1516, 104
    %1518 = vset.pattern.permute.xlu0 %v1517
    %1519 = vperm.xlu0 %1518, %v1436
    %v1520 = vpop.permute.xlu0 %1519
    %v1521 = vlaneseq
    %v1522 = vshrl.u32 %v1521, 7
    %v1523 = vadd.s32 %v1522, 112
    %1524 = vset.pattern.permute.xlu0 %v1523
    %1525 = vperm.xlu0 %1524, %v1436
    %v1526 = vpop.permute.xlu0 %1525
    %v1527 = vlaneseq
    %v1528 = vshrl.u32 %v1527, 7
    %v1529 = vadd.s32 %v1528, 120
    %1530 = vset.pattern.permute.xlu0 %v1529
    %1531 = vperm.xlu0 %1530, %v1436
    %v1532 = vpop.permute.xlu0 %1531
    %v1533 = vperm.slane %v1336, 2
    %v1534 = vlaneseq
    %v1535 = vshrl.u32 %v1534, 7
    %1537 = vset.pattern.permute.xlu0 %v1535
    %1538 = vperm.xlu0 %1537, %v1533
    %v1539 = vpop.permute.xlu0 %1538
    %v1540 = vlaneseq
    %v1541 = vshrl.u32 %v1540, 7
    %v1542 = vadd.s32 %v1541, 8
    %1543 = vset.pattern.permute.xlu0 %v1542
    %1544 = vperm.xlu0 %1543, %v1533
    %v1545 = vpop.permute.xlu0 %1544
    %v1546 = vlaneseq
    %v1547 = vshrl.u32 %v1546, 7
    %v1548 = vadd.s32 %v1547, 16
    %1549 = vset.pattern.permute.xlu0 %v1548
    %1550 = vperm.xlu0 %1549, %v1533
    %v1551 = vpop.permute.xlu0 %1550
    %v1552 = vlaneseq
    %v1553 = vshrl.u32 %v1552, 7
    %v1554 = vadd.s32 %v1553, 24
    %1555 = vset.pattern.permute.xlu0 %v1554
    %1556 = vperm.xlu0 %1555, %v1533
    %v1557 = vpop.permute.xlu0 %1556
    %v1558 = vlaneseq
    %v1559 = vshrl.u32 %v1558, 7
    %v1560 = vadd.s32 %v1559, 32
    %1561 = vset.pattern.permute.xlu0 %v1560
    %1562 = vperm.xlu0 %1561, %v1533
    %v1563 = vpop.permute.xlu0 %1562
    %v1564 = vlaneseq
    %v1565 = vshrl.u32 %v1564, 7
    %v1566 = vadd.s32 %v1565, 40
    %1567 = vset.pattern.permute.xlu0 %v1566
    %1568 = vperm.xlu0 %1567, %v1533
    %v1569 = vpop.permute.xlu0 %1568
    %v1570 = vlaneseq
    %v1571 = vshrl.u32 %v1570, 7
    %v1572 = vadd.s32 %v1571, 48
    %1573 = vset.pattern.permute.xlu0 %v1572
    %1574 = vperm.xlu0 %1573, %v1533
    %v1575 = vpop.permute.xlu0 %1574
    %v1576 = vlaneseq
    %v1577 = vshrl.u32 %v1576, 7
    %v1578 = vadd.s32 %v1577, 56
    %1579 = vset.pattern.permute.xlu0 %v1578
    %1580 = vperm.xlu0 %1579, %v1533
    %v1581 = vpop.permute.xlu0 %1580
    %v1582 = vlaneseq
    %v1583 = vshrl.u32 %v1582, 7
    %v1584 = vadd.s32 %v1583, 64
    %1585 = vset.pattern.permute.xlu0 %v1584
    %1586 = vperm.xlu0 %1585, %v1533
    %v1587 = vpop.permute.xlu0 %1586
    %v1588 = vlaneseq
    %v1589 = vshrl.u32 %v1588, 7
    %v1590 = vadd.s32 %v1589, 72
    %1591 = vset.pattern.permute.xlu0 %v1590
    %1592 = vperm.xlu0 %1591, %v1533
    %v1593 = vpop.permute.xlu0 %1592
    %v1594 = vlaneseq
    %v1595 = vshrl.u32 %v1594, 7
    %v1596 = vadd.s32 %v1595, 80
    %1597 = vset.pattern.permute.xlu0 %v1596
    %1598 = vperm.xlu0 %1597, %v1533
    %v1599 = vpop.permute.xlu0 %1598
    %v1600 = vlaneseq
    %v1601 = vshrl.u32 %v1600, 7
    %v1602 = vadd.s32 %v1601, 88
    %1603 = vset.pattern.permute.xlu0 %v1602
    %1604 = vperm.xlu0 %1603, %v1533
    %v1605 = vpop.permute.xlu0 %1604
    %v1606 = vlaneseq
    %v1607 = vshrl.u32 %v1606, 7
    %v1608 = vadd.s32 %v1607, 96
    %1609 = vset.pattern.permute.xlu0 %v1608
    %1610 = vperm.xlu0 %1609, %v1533
    %v1611 = vpop.permute.xlu0 %1610
    %v1612 = vlaneseq
    %v1613 = vshrl.u32 %v1612, 7
    %v1614 = vadd.s32 %v1613, 104
    %1615 = vset.pattern.permute.xlu0 %v1614
    %1616 = vperm.xlu0 %1615, %v1533
    %v1617 = vpop.permute.xlu0 %1616
    %v1618 = vlaneseq
    %v1619 = vshrl.u32 %v1618, 7
    %v1620 = vadd.s32 %v1619, 112
    %1621 = vset.pattern.permute.xlu0 %v1620
    %1622 = vperm.xlu0 %1621, %v1533
    %v1623 = vpop.permute.xlu0 %1622
    %v1624 = vlaneseq
    %v1625 = vshrl.u32 %v1624, 7
    %v1626 = vadd.s32 %v1625, 120
    %1627 = vset.pattern.permute.xlu0 %v1626
    %1628 = vperm.xlu0 %1627, %v1533
    %v1629 = vpop.permute.xlu0 %1628
    %v1630 = vperm.slane %v1336, 3
    %v1631 = vlaneseq
    %v1632 = vshrl.u32 %v1631, 7
    %1634 = vset.pattern.permute.xlu0 %v1632
    %1635 = vperm.xlu0 %1634, %v1630
    %v1636 = vpop.permute.xlu0 %1635
    %v1637 = vlaneseq
    %v1638 = vshrl.u32 %v1637, 7
    %v1639 = vadd.s32 %v1638, 8
    %1640 = vset.pattern.permute.xlu0 %v1639
    %1641 = vperm.xlu0 %1640, %v1630
    %v1642 = vpop.permute.xlu0 %1641
    %v1643 = vlaneseq
    %v1644 = vshrl.u32 %v1643, 7
    %v1645 = vadd.s32 %v1644, 16
    %1646 = vset.pattern.permute.xlu0 %v1645
    %1647 = vperm.xlu0 %1646, %v1630
    %v1648 = vpop.permute.xlu0 %1647
    %v1649 = vlaneseq
    %v1650 = vshrl.u32 %v1649, 7
    %v1651 = vadd.s32 %v1650, 24
    %1652 = vset.pattern.permute.xlu0 %v1651
    %1653 = vperm.xlu0 %1652, %v1630
    %v1654 = vpop.permute.xlu0 %1653
    %v1655 = vlaneseq
    %v1656 = vshrl.u32 %v1655, 7
    %v1657 = vadd.s32 %v1656, 32
    %1658 = vset.pattern.permute.xlu0 %v1657
    %1659 = vperm.xlu0 %1658, %v1630
    %v1660 = vpop.permute.xlu0 %1659
    %v1661 = vlaneseq
    %v1662 = vshrl.u32 %v1661, 7
    %v1663 = vadd.s32 %v1662, 40
    %1664 = vset.pattern.permute.xlu0 %v1663
    %1665 = vperm.xlu0 %1664, %v1630
    %v1666 = vpop.permute.xlu0 %1665
    %v1667 = vlaneseq
    %v1668 = vshrl.u32 %v1667, 7
    %v1669 = vadd.s32 %v1668, 48
    %1670 = vset.pattern.permute.xlu0 %v1669
    %1671 = vperm.xlu0 %1670, %v1630
    %v1672 = vpop.permute.xlu0 %1671
    %v1673 = vlaneseq
    %v1674 = vshrl.u32 %v1673, 7
    %v1675 = vadd.s32 %v1674, 56
    %1676 = vset.pattern.permute.xlu0 %v1675
    %1677 = vperm.xlu0 %1676, %v1630
    %v1678 = vpop.permute.xlu0 %1677
    %v1679 = vlaneseq
    %v1680 = vshrl.u32 %v1679, 7
    %v1681 = vadd.s32 %v1680, 64
    %1682 = vset.pattern.permute.xlu0 %v1681
    %1683 = vperm.xlu0 %1682, %v1630
    %v1684 = vpop.permute.xlu0 %1683
    %v1685 = vlaneseq
    %v1686 = vshrl.u32 %v1685, 7
    %v1687 = vadd.s32 %v1686, 72
    %1688 = vset.pattern.permute.xlu0 %v1687
    %1689 = vperm.xlu0 %1688, %v1630
    %v1690 = vpop.permute.xlu0 %1689
    %v1691 = vlaneseq
    %v1692 = vshrl.u32 %v1691, 7
    %v1693 = vadd.s32 %v1692, 80
    %1694 = vset.pattern.permute.xlu0 %v1693
    %1695 = vperm.xlu0 %1694, %v1630
    %v1696 = vpop.permute.xlu0 %1695
    %v1697 = vlaneseq
    %v1698 = vshrl.u32 %v1697, 7
    %v1699 = vadd.s32 %v1698, 88
    %1700 = vset.pattern.permute.xlu0 %v1699
    %1701 = vperm.xlu0 %1700, %v1630
    %v1702 = vpop.permute.xlu0 %1701
    %v1703 = vlaneseq
    %v1704 = vshrl.u32 %v1703, 7
    %v1705 = vadd.s32 %v1704, 96
    %1706 = vset.pattern.permute.xlu0 %v1705
    %1707 = vperm.xlu0 %1706, %v1630
    %v1708 = vpop.permute.xlu0 %1707
    %v1709 = vlaneseq
    %v1710 = vshrl.u32 %v1709, 7
    %v1711 = vadd.s32 %v1710, 104
    %1712 = vset.pattern.permute.xlu0 %v1711
    %1713 = vperm.xlu0 %1712, %v1630
    %v1714 = vpop.permute.xlu0 %1713
    %v1715 = vlaneseq
    %v1716 = vshrl.u32 %v1715, 7
    %v1717 = vadd.s32 %v1716, 112
    %1718 = vset.pattern.permute.xlu0 %v1717
    %1719 = vperm.xlu0 %1718, %v1630
    %v1720 = vpop.permute.xlu0 %1719
    %v1721 = vlaneseq
    %v1722 = vshrl.u32 %v1721, 7
    %v1723 = vadd.s32 %v1722, 120
    %1724 = vset.pattern.permute.xlu0 %v1723
    %1725 = vperm.xlu0 %1724, %v1630
    %v1726 = vpop.permute.xlu0 %1725
    %v1727 = vperm.slane %v1336, 4
    %v1728 = vlaneseq
    %v1729 = vshrl.u32 %v1728, 7
    %1731 = vset.pattern.permute.xlu0 %v1729
    %1732 = vperm.xlu0 %1731, %v1727
    %v1733 = vpop.permute.xlu0 %1732
    %v1734 = vlaneseq
    %v1735 = vshrl.u32 %v1734, 7
    %v1736 = vadd.s32 %v1735, 8
    %1737 = vset.pattern.permute.xlu0 %v1736
    %1738 = vperm.xlu0 %1737, %v1727
    %v1739 = vpop.permute.xlu0 %1738
    %v1740 = vlaneseq
    %v1741 = vshrl.u32 %v1740, 7
    %v1742 = vadd.s32 %v1741, 16
    %1743 = vset.pattern.permute.xlu0 %v1742
    %1744 = vperm.xlu0 %1743, %v1727
    %v1745 = vpop.permute.xlu0 %1744
    %v1746 = vlaneseq
    %v1747 = vshrl.u32 %v1746, 7
    %v1748 = vadd.s32 %v1747, 24
    %1749 = vset.pattern.permute.xlu0 %v1748
    %1750 = vperm.xlu0 %1749, %v1727
    %v1751 = vpop.permute.xlu0 %1750
    %v1752 = vlaneseq
    %v1753 = vshrl.u32 %v1752, 7
    %v1754 = vadd.s32 %v1753, 32
    %1755 = vset.pattern.permute.xlu0 %v1754
    %1756 = vperm.xlu0 %1755, %v1727
    %v1757 = vpop.permute.xlu0 %1756
    %v1758 = vlaneseq
    %v1759 = vshrl.u32 %v1758, 7
    %v1760 = vadd.s32 %v1759, 40
    %1761 = vset.pattern.permute.xlu0 %v1760
    %1762 = vperm.xlu0 %1761, %v1727
    %v1763 = vpop.permute.xlu0 %1762
    %v1764 = vlaneseq
    %v1765 = vshrl.u32 %v1764, 7
    %v1766 = vadd.s32 %v1765, 48
    %1767 = vset.pattern.permute.xlu0 %v1766
    %1768 = vperm.xlu0 %1767, %v1727
    %v1769 = vpop.permute.xlu0 %1768
    %v1770 = vlaneseq
    %v1771 = vshrl.u32 %v1770, 7
    %v1772 = vadd.s32 %v1771, 56
    %1773 = vset.pattern.permute.xlu0 %v1772
    %1774 = vperm.xlu0 %1773, %v1727
    %v1775 = vpop.permute.xlu0 %1774
    %v1776 = vlaneseq
    %v1777 = vshrl.u32 %v1776, 7
    %v1778 = vadd.s32 %v1777, 64
    %1779 = vset.pattern.permute.xlu0 %v1778
    %1780 = vperm.xlu0 %1779, %v1727
    %v1781 = vpop.permute.xlu0 %1780
    %v1782 = vlaneseq
    %v1783 = vshrl.u32 %v1782, 7
    %v1784 = vadd.s32 %v1783, 72
    %1785 = vset.pattern.permute.xlu0 %v1784
    %1786 = vperm.xlu0 %1785, %v1727
    %v1787 = vpop.permute.xlu0 %1786
    %v1788 = vlaneseq
    %v1789 = vshrl.u32 %v1788, 7
    %v1790 = vadd.s32 %v1789, 80
    %1791 = vset.pattern.permute.xlu0 %v1790
    %1792 = vperm.xlu0 %1791, %v1727
    %v1793 = vpop.permute.xlu0 %1792
    %v1794 = vlaneseq
    %v1795 = vshrl.u32 %v1794, 7
    %v1796 = vadd.s32 %v1795, 88
    %1797 = vset.pattern.permute.xlu0 %v1796
    %1798 = vperm.xlu0 %1797, %v1727
    %v1799 = vpop.permute.xlu0 %1798
    %v1800 = vlaneseq
    %v1801 = vshrl.u32 %v1800, 7
    %v1802 = vadd.s32 %v1801, 96
    %1803 = vset.pattern.permute.xlu0 %v1802
    %1804 = vperm.xlu0 %1803, %v1727
    %v1805 = vpop.permute.xlu0 %1804
    %v1806 = vlaneseq
    %v1807 = vshrl.u32 %v1806, 7
    %v1808 = vadd.s32 %v1807, 104
    %1809 = vset.pattern.permute.xlu0 %v1808
    %1810 = vperm.xlu0 %1809, %v1727
    %v1811 = vpop.permute.xlu0 %1810
    %v1812 = vlaneseq
    %v1813 = vshrl.u32 %v1812, 7
    %v1814 = vadd.s32 %v1813, 112
    %1815 = vset.pattern.permute.xlu0 %v1814
    %1816 = vperm.xlu0 %1815, %v1727
    %v1817 = vpop.permute.xlu0 %1816
    %v1818 = vlaneseq
    %v1819 = vshrl.u32 %v1818, 7
    %v1820 = vadd.s32 %v1819, 120
    %1821 = vset.pattern.permute.xlu0 %v1820
    %1822 = vperm.xlu0 %1821, %v1727
    %v1823 = vpop.permute.xlu0 %1822
    %v1824 = vperm.slane %v1336, 5
    %v1825 = vlaneseq
    %v1826 = vshrl.u32 %v1825, 7
    %1828 = vset.pattern.permute.xlu0 %v1826
    %1829 = vperm.xlu0 %1828, %v1824
    %v1830 = vpop.permute.xlu0 %1829
    %v1831 = vlaneseq
    %v1832 = vshrl.u32 %v1831, 7
    %v1833 = vadd.s32 %v1832, 8
    %1834 = vset.pattern.permute.xlu0 %v1833
    %1835 = vperm.xlu0 %1834, %v1824
    %v1836 = vpop.permute.xlu0 %1835
    %v1837 = vlaneseq
    %v1838 = vshrl.u32 %v1837, 7
    %v1839 = vadd.s32 %v1838, 16
    %1840 = vset.pattern.permute.xlu0 %v1839
    %1841 = vperm.xlu0 %1840, %v1824
    %v1842 = vpop.permute.xlu0 %1841
    %v1843 = vlaneseq
    %v1844 = vshrl.u32 %v1843, 7
    %v1845 = vadd.s32 %v1844, 24
    %1846 = vset.pattern.permute.xlu0 %v1845
    %1847 = vperm.xlu0 %1846, %v1824
    %v1848 = vpop.permute.xlu0 %1847
    %v1849 = vlaneseq
    %v1850 = vshrl.u32 %v1849, 7
    %v1851 = vadd.s32 %v1850, 32
    %1852 = vset.pattern.permute.xlu0 %v1851
    %1853 = vperm.xlu0 %1852, %v1824
    %v1854 = vpop.permute.xlu0 %1853
    %v1855 = vlaneseq
    %v1856 = vshrl.u32 %v1855, 7
    %v1857 = vadd.s32 %v1856, 40
    %1858 = vset.pattern.permute.xlu0 %v1857
    %1859 = vperm.xlu0 %1858, %v1824
    %v1860 = vpop.permute.xlu0 %1859
    %v1861 = vlaneseq
    %v1862 = vshrl.u32 %v1861, 7
    %v1863 = vadd.s32 %v1862, 48
    %1864 = vset.pattern.permute.xlu0 %v1863
    %1865 = vperm.xlu0 %1864, %v1824
    %v1866 = vpop.permute.xlu0 %1865
    %v1867 = vlaneseq
    %v1868 = vshrl.u32 %v1867, 7
    %v1869 = vadd.s32 %v1868, 56
    %1870 = vset.pattern.permute.xlu0 %v1869
    %1871 = vperm.xlu0 %1870, %v1824
    %v1872 = vpop.permute.xlu0 %1871
    %v1873 = vlaneseq
    %v1874 = vshrl.u32 %v1873, 7
    %v1875 = vadd.s32 %v1874, 64
    %1876 = vset.pattern.permute.xlu0 %v1875
    %1877 = vperm.xlu0 %1876, %v1824
    %v1878 = vpop.permute.xlu0 %1877
    %v1879 = vlaneseq
    %v1880 = vshrl.u32 %v1879, 7
    %v1881 = vadd.s32 %v1880, 72
    %1882 = vset.pattern.permute.xlu0 %v1881
    %1883 = vperm.xlu0 %1882, %v1824
    %v1884 = vpop.permute.xlu0 %1883
    %v1885 = vlaneseq
    %v1886 = vshrl.u32 %v1885, 7
    %v1887 = vadd.s32 %v1886, 80
    %1888 = vset.pattern.permute.xlu0 %v1887
    %1889 = vperm.xlu0 %1888, %v1824
    %v1890 = vpop.permute.xlu0 %1889
    %v1891 = vlaneseq
    %v1892 = vshrl.u32 %v1891, 7
    %v1893 = vadd.s32 %v1892, 88
    %1894 = vset.pattern.permute.xlu0 %v1893
    %1895 = vperm.xlu0 %1894, %v1824
    %v1896 = vpop.permute.xlu0 %1895
    %v1897 = vlaneseq
    %v1898 = vshrl.u32 %v1897, 7
    %v1899 = vadd.s32 %v1898, 96
    %1900 = vset.pattern.permute.xlu0 %v1899
    %1901 = vperm.xlu0 %1900, %v1824
    %v1902 = vpop.permute.xlu0 %1901
    %v1903 = vlaneseq
    %v1904 = vshrl.u32 %v1903, 7
    %v1905 = vadd.s32 %v1904, 104
    %1906 = vset.pattern.permute.xlu0 %v1905
    %1907 = vperm.xlu0 %1906, %v1824
    %v1908 = vpop.permute.xlu0 %1907
    %v1909 = vlaneseq
    %v1910 = vshrl.u32 %v1909, 7
    %v1911 = vadd.s32 %v1910, 112
    %1912 = vset.pattern.permute.xlu0 %v1911
    %1913 = vperm.xlu0 %1912, %v1824
    %v1914 = vpop.permute.xlu0 %1913
    %v1915 = vlaneseq
    %v1916 = vshrl.u32 %v1915, 7
    %v1917 = vadd.s32 %v1916, 120
    %1918 = vset.pattern.permute.xlu0 %v1917
    %1919 = vperm.xlu0 %1918, %v1824
    %v1920 = vpop.permute.xlu0 %1919
    %v1921 = vperm.slane %v1336, 6
    %v1922 = vlaneseq
    %v1923 = vshrl.u32 %v1922, 7
    %1925 = vset.pattern.permute.xlu0 %v1923
    %1926 = vperm.xlu0 %1925, %v1921
    %v1927 = vpop.permute.xlu0 %1926
    %v1928 = vlaneseq
    %v1929 = vshrl.u32 %v1928, 7
    %v1930 = vadd.s32 %v1929, 8
    %1931 = vset.pattern.permute.xlu0 %v1930
    %1932 = vperm.xlu0 %1931, %v1921
    %v1933 = vpop.permute.xlu0 %1932
    %v1934 = vlaneseq
    %v1935 = vshrl.u32 %v1934, 7
    %v1936 = vadd.s32 %v1935, 16
    %1937 = vset.pattern.permute.xlu0 %v1936
    %1938 = vperm.xlu0 %1937, %v1921
    %v1939 = vpop.permute.xlu0 %1938
    %v1940 = vlaneseq
    %v1941 = vshrl.u32 %v1940, 7
    %v1942 = vadd.s32 %v1941, 24
    %1943 = vset.pattern.permute.xlu0 %v1942
    %1944 = vperm.xlu0 %1943, %v1921
    %v1945 = vpop.permute.xlu0 %1944
    %v1946 = vlaneseq
    %v1947 = vshrl.u32 %v1946, 7
    %v1948 = vadd.s32 %v1947, 32
    %1949 = vset.pattern.permute.xlu0 %v1948
    %1950 = vperm.xlu0 %1949, %v1921
    %v1951 = vpop.permute.xlu0 %1950
    %v1952 = vlaneseq
    %v1953 = vshrl.u32 %v1952, 7
    %v1954 = vadd.s32 %v1953, 40
    %1955 = vset.pattern.permute.xlu0 %v1954
    %1956 = vperm.xlu0 %1955, %v1921
    %v1957 = vpop.permute.xlu0 %1956
    %v1958 = vlaneseq
    %v1959 = vshrl.u32 %v1958, 7
    %v1960 = vadd.s32 %v1959, 48
    %1961 = vset.pattern.permute.xlu0 %v1960
    %1962 = vperm.xlu0 %1961, %v1921
    %v1963 = vpop.permute.xlu0 %1962
    %v1964 = vlaneseq
    %v1965 = vshrl.u32 %v1964, 7
    %v1966 = vadd.s32 %v1965, 56
    %1967 = vset.pattern.permute.xlu0 %v1966
    %1968 = vperm.xlu0 %1967, %v1921
    %v1969 = vpop.permute.xlu0 %1968
    %v1970 = vlaneseq
    %v1971 = vshrl.u32 %v1970, 7
    %v1972 = vadd.s32 %v1971, 64
    %1973 = vset.pattern.permute.xlu0 %v1972
    %1974 = vperm.xlu0 %1973, %v1921
    %v1975 = vpop.permute.xlu0 %1974
    %v1976 = vlaneseq
    %v1977 = vshrl.u32 %v1976, 7
    %v1978 = vadd.s32 %v1977, 72
    %1979 = vset.pattern.permute.xlu0 %v1978
    %1980 = vperm.xlu0 %1979, %v1921
    %v1981 = vpop.permute.xlu0 %1980
    %v1982 = vlaneseq
    %v1983 = vshrl.u32 %v1982, 7
    %v1984 = vadd.s32 %v1983, 80
    %1985 = vset.pattern.permute.xlu0 %v1984
    %1986 = vperm.xlu0 %1985, %v1921
    %v1987 = vpop.permute.xlu0 %1986
    %v1988 = vlaneseq
    %v1989 = vshrl.u32 %v1988, 7
    %v1990 = vadd.s32 %v1989, 88
    %1991 = vset.pattern.permute.xlu0 %v1990
    %1992 = vperm.xlu0 %1991, %v1921
    %v1993 = vpop.permute.xlu0 %1992
    %v1994 = vlaneseq
    %v1995 = vshrl.u32 %v1994, 7
    %v1996 = vadd.s32 %v1995, 96
    %1997 = vset.pattern.permute.xlu0 %v1996
    %1998 = vperm.xlu0 %1997, %v1921
    %v1999 = vpop.permute.xlu0 %1998
    %v2000 = vlaneseq
    %v2001 = vshrl.u32 %v2000, 7
    %v2002 = vadd.s32 %v2001, 104
    %2003 = vset.pattern.permute.xlu0 %v2002
    %2004 = vperm.xlu0 %2003, %v1921
    %v2005 = vpop.permute.xlu0 %2004
    %v2006 = vlaneseq
    %v2007 = vshrl.u32 %v2006, 7
    %v2008 = vadd.s32 %v2007, 112
    %2009 = vset.pattern.permute.xlu0 %v2008
    %2010 = vperm.xlu0 %2009, %v1921
    %v2011 = vpop.permute.xlu0 %2010
    %v2012 = vlaneseq
    %v2013 = vshrl.u32 %v2012, 7
    %v2014 = vadd.s32 %v2013, 120
    %2015 = vset.pattern.permute.xlu0 %v2014
    %2016 = vperm.xlu0 %2015, %v1921
    %v2017 = vpop.permute.xlu0 %2016
    %v2018 = vperm.slane %v1336, 7
    %v2019 = vlaneseq
    %v2020 = vshrl.u32 %v2019, 7
    %2022 = vset.pattern.permute.xlu0 %v2020
    %2023 = vperm.xlu0 %2022, %v2018
    %v2024 = vpop.permute.xlu0 %2023
    %v2025 = vlaneseq
    %v2026 = vshrl.u32 %v2025, 7
    %v2027 = vadd.s32 %v2026, 8
    %2028 = vset.pattern.permute.xlu0 %v2027
    %2029 = vperm.xlu0 %2028, %v2018
    %v2030 = vpop.permute.xlu0 %2029
    %v2031 = vlaneseq
    %v2032 = vshrl.u32 %v2031, 7
    %v2033 = vadd.s32 %v2032, 16
    %2034 = vset.pattern.permute.xlu0 %v2033
    %2035 = vperm.xlu0 %2034, %v2018
    %v2036 = vpop.permute.xlu0 %2035
    %v2037 = vlaneseq
    %v2038 = vshrl.u32 %v2037, 7
    %v2039 = vadd.s32 %v2038, 24
    %2040 = vset.pattern.permute.xlu0 %v2039
    %2041 = vperm.xlu0 %2040, %v2018
    %v2042 = vpop.permute.xlu0 %2041
    %v2043 = vlaneseq
    %v2044 = vshrl.u32 %v2043, 7
    %v2045 = vadd.s32 %v2044, 32
    %2046 = vset.pattern.permute.xlu0 %v2045
    %2047 = vperm.xlu0 %2046, %v2018
    %v2048 = vpop.permute.xlu0 %2047
    %v2049 = vlaneseq
    %v2050 = vshrl.u32 %v2049, 7
    %v2051 = vadd.s32 %v2050, 40
    %2052 = vset.pattern.permute.xlu0 %v2051
    %2053 = vperm.xlu0 %2052, %v2018
    %v2054 = vpop.permute.xlu0 %2053
    %v2055 = vlaneseq
    %v2056 = vshrl.u32 %v2055, 7
    %v2057 = vadd.s32 %v2056, 48
    %2058 = vset.pattern.permute.xlu0 %v2057
    %2059 = vperm.xlu0 %2058, %v2018
    %v2060 = vpop.permute.xlu0 %2059
    %v2061 = vlaneseq
    %v2062 = vshrl.u32 %v2061, 7
    %v2063 = vadd.s32 %v2062, 56
    %2064 = vset.pattern.permute.xlu0 %v2063
    %2065 = vperm.xlu0 %2064, %v2018
    %v2066 = vpop.permute.xlu0 %2065
    %v2067 = vlaneseq
    %v2068 = vshrl.u32 %v2067, 7
    %v2069 = vadd.s32 %v2068, 64
    %2070 = vset.pattern.permute.xlu0 %v2069
    %2071 = vperm.xlu0 %2070, %v2018
    %v2072 = vpop.permute.xlu0 %2071
    %v2073 = vlaneseq
    %v2074 = vshrl.u32 %v2073, 7
    %v2075 = vadd.s32 %v2074, 72
    %2076 = vset.pattern.permute.xlu0 %v2075
    %2077 = vperm.xlu0 %2076, %v2018
    %v2078 = vpop.permute.xlu0 %2077
    %v2079 = vlaneseq
    %v2080 = vshrl.u32 %v2079, 7
    %v2081 = vadd.s32 %v2080, 80
    %2082 = vset.pattern.permute.xlu0 %v2081
    %2083 = vperm.xlu0 %2082, %v2018
    %v2084 = vpop.permute.xlu0 %2083
    %v2085 = vlaneseq
    %v2086 = vshrl.u32 %v2085, 7
    %v2087 = vadd.s32 %v2086, 88
    %2088 = vset.pattern.permute.xlu0 %v2087
    %2089 = vperm.xlu0 %2088, %v2018
    %v2090 = vpop.permute.xlu0 %2089
    %v2091 = vlaneseq
    %v2092 = vshrl.u32 %v2091, 7
    %v2093 = vadd.s32 %v2092, 96
    %2094 = vset.pattern.permute.xlu0 %v2093
    %2095 = vperm.xlu0 %2094, %v2018
    %v2096 = vpop.permute.xlu0 %2095
    %v2097 = vlaneseq
    %v2098 = vshrl.u32 %v2097, 7
    %v2099 = vadd.s32 %v2098, 104
    %2100 = vset.pattern.permute.xlu0 %v2099
    %2101 = vperm.xlu0 %2100, %v2018
    %v2102 = vpop.permute.xlu0 %2101
    %v2103 = vlaneseq
    %v2104 = vshrl.u32 %v2103, 7
    %v2105 = vadd.s32 %v2104, 112
    %2106 = vset.pattern.permute.xlu0 %v2105
    %2107 = vperm.xlu0 %2106, %v2018
    %v2108 = vpop.permute.xlu0 %2107
    %v2109 = vlaneseq
    %v2110 = vshrl.u32 %v2109, 7
    %v2111 = vadd.s32 %v2110, 120
    %2112 = vset.pattern.permute.xlu0 %v2111
    %2113 = vperm.xlu0 %2112, %v2018
    %v2114 = vpop.permute.xlu0 %2113
    %v2243 = vadd.f32 %v928, %v1345
    %v2244 = vadd.f32 %v931, %v1351
    %v2245 = vadd.f32 %v934, %v1357
    %v2246 = vadd.f32 %v937, %v1363
    %v2247 = vadd.f32 %v940, %v1369
    %v2248 = vadd.f32 %v943, %v1375
    %v2249 = vadd.f32 %v946, %v1381
    %v2250 = vadd.f32 %v949, %v1387
    %v2251 = vadd.f32 %v952, %v1393
    %v2252 = vadd.f32 %v955, %v1399
    %v2253 = vadd.f32 %v958, %v1405
    %v2254 = vadd.f32 %v961, %v1411
    %v2255 = vadd.f32 %v964, %v1417
    %v2256 = vadd.f32 %v967, %v1423
    %v2257 = vadd.f32 %v970, %v1429
    %v2258 = vadd.f32 %v973, %v1435
    %v2259 = vadd.f32 %v976, %v1442
    %v2260 = vadd.f32 %v979, %v1448
    %v2261 = vadd.f32 %v982, %v1454
    %v2262 = vadd.f32 %v985, %v1460
    %v2263 = vadd.f32 %v988, %v1466
    %v2264 = vadd.f32 %v991, %v1472
    %v2265 = vadd.f32 %v994, %v1478
    %v2266 = vadd.f32 %v997, %v1484
    %v2267 = vadd.f32 %v1000, %v1490
    %v2268 = vadd.f32 %v1003, %v1496
    %v2269 = vadd.f32 %v1006, %v1502
    %v2270 = vadd.f32 %v1009, %v1508
    %v2271 = vadd.f32 %v1012, %v1514
    %v2272 = vadd.f32 %v1015, %v1520
    %v2273 = vadd.f32 %v1018, %v1526
    %v2274 = vadd.f32 %v1021, %v1532
    %v2275 = vadd.f32 %v1024, %v1539
    %v2276 = vadd.f32 %v1027, %v1545
    %v2277 = vadd.f32 %v1030, %v1551
    %v2278 = vadd.f32 %v1033, %v1557
    %v2279 = vadd.f32 %v1036, %v1563
    %v2280 = vadd.f32 %v1039, %v1569
    %v2281 = vadd.f32 %v1042, %v1575
    %v2282 = vadd.f32 %v1045, %v1581
    %v2283 = vadd.f32 %v1048, %v1587
    %v2284 = vadd.f32 %v1051, %v1593
    %v2285 = vadd.f32 %v1054, %v1599
    %v2286 = vadd.f32 %v1057, %v1605
    %v2287 = vadd.f32 %v1060, %v1611
    %v2288 = vadd.f32 %v1063, %v1617
    %v2289 = vadd.f32 %v1066, %v1623
    %v2290 = vadd.f32 %v1069, %v1629
    %v2291 = vadd.f32 %v1072, %v1636
    %v2292 = vadd.f32 %v1075, %v1642
    %v2293 = vadd.f32 %v1078, %v1648
    %v2294 = vadd.f32 %v1081, %v1654
    %v2295 = vadd.f32 %v1084, %v1660
    %v2296 = vadd.f32 %v1087, %v1666
    %v2297 = vadd.f32 %v1090, %v1672
    %v2298 = vadd.f32 %v1093, %v1678
    %v2299 = vadd.f32 %v1096, %v1684
    %v2300 = vadd.f32 %v1099, %v1690
    %v2301 = vadd.f32 %v1102, %v1696
    %v2302 = vadd.f32 %v1105, %v1702
    %v2303 = vadd.f32 %v1108, %v1708
    %v2304 = vadd.f32 %v1111, %v1714
    %v2305 = vadd.f32 %v1114, %v1720
    %v2306 = vadd.f32 %v1117, %v1726
    %v2307 = vadd.f32 %v1120, %v1733
    %v2308 = vadd.f32 %v1123, %v1739
    %v2309 = vadd.f32 %v1126, %v1745
    %v2310 = vadd.f32 %v1129, %v1751
    %v2311 = vadd.f32 %v1132, %v1757
    %v2312 = vadd.f32 %v1135, %v1763
    %v2313 = vadd.f32 %v1138, %v1769
    %v2314 = vadd.f32 %v1141, %v1775
    %v2315 = vadd.f32 %v1144, %v1781
    %v2316 = vadd.f32 %v1147, %v1787
    %v2317 = vadd.f32 %v1150, %v1793
    %v2318 = vadd.f32 %v1153, %v1799
    %v2319 = vadd.f32 %v1156, %v1805
    %v2320 = vadd.f32 %v1159, %v1811
    %v2321 = vadd.f32 %v1162, %v1817
    %v2322 = vadd.f32 %v1165, %v1823
    %v2323 = vadd.f32 %v1168, %v1830
    %v2324 = vadd.f32 %v1171, %v1836
    %v2325 = vadd.f32 %v1174, %v1842
    %v2326 = vadd.f32 %v1177, %v1848
    %v2327 = vadd.f32 %v1180, %v1854
    %v2328 = vadd.f32 %v1183, %v1860
    %v2329 = vadd.f32 %v1186, %v1866
    %v2330 = vadd.f32 %v1189, %v1872
    %v2331 = vadd.f32 %v1192, %v1878
    %v2332 = vadd.f32 %v1195, %v1884
    %v2333 = vadd.f32 %v1198, %v1890
    %v2334 = vadd.f32 %v1201, %v1896
    %v2335 = vadd.f32 %v1204, %v1902
    %v2336 = vadd.f32 %v1207, %v1908
    %v2337 = vadd.f32 %v1210, %v1914
    %v2338 = vadd.f32 %v1213, %v1920
    %v2339 = vadd.f32 %v1216, %v1927
    %v2340 = vadd.f32 %v1219, %v1933
    %v2341 = vadd.f32 %v1222, %v1939
    %v2342 = vadd.f32 %v1225, %v1945
    %v2343 = vadd.f32 %v1228, %v1951
    %v2344 = vadd.f32 %v1231, %v1957
    %v2345 = vadd.f32 %v1234, %v1963
    %v2346 = vadd.f32 %v1237, %v1969
    %v2347 = vadd.f32 %v1240, %v1975
    %v2348 = vadd.f32 %v1243, %v1981
    %v2349 = vadd.f32 %v1246, %v1987
    %v2350 = vadd.f32 %v1249, %v1993
    %v2351 = vadd.f32 %v1252, %v1999
    %v2352 = vadd.f32 %v1255, %v2005
    %v2353 = vadd.f32 %v1258, %v2011
    %v2354 = vadd.f32 %v1261, %v2017
    %v2355 = vadd.f32 %v1264, %v2024
    %v2356 = vadd.f32 %v1267, %v2030
    %v2357 = vadd.f32 %v1270, %v2036
    %v2358 = vadd.f32 %v1273, %v2042
    %v2359 = vadd.f32 %v1276, %v2048
    %v2360 = vadd.f32 %v1279, %v2054
    %v2361 = vadd.f32 %v1282, %v2060
    %v2362 = vadd.f32 %v1285, %v2066
    %v2363 = vadd.f32 %v1288, %v2072
    %v2364 = vadd.f32 %v1291, %v2078
    %v2365 = vadd.f32 %v1294, %v2084
    %v2366 = vadd.f32 %v1297, %v2090
    %v2367 = vadd.f32 %v1300, %v2096
    %v2368 = vadd.f32 %v1303, %v2102
    %v2369 = vadd.f32 %v1306, %v2108
    %v2370 = vadd.f32 %v1309, %v2114
    %s2371 = sld [smem:[#allocation2]]
    %v2372 = vstv %s2371
    %v2373 = vadd.f32 %v2243, %v2372
    %v2374 = vadd.f32 %v2244, %v2372
    %v2375 = vadd.f32 %v2245, %v2372
    %v2376 = vadd.f32 %v2246, %v2372
    %v2377 = vadd.f32 %v2247, %v2372
    %v2378 = vadd.f32 %v2248, %v2372
    %v2379 = vadd.f32 %v2249, %v2372
    %v2380 = vadd.f32 %v2250, %v2372
    %v2381 = vadd.f32 %v2251, %v2372
    %v2382 = vadd.f32 %v2252, %v2372
    %v2383 = vadd.f32 %v2253, %v2372
    %v2384 = vadd.f32 %v2254, %v2372
    %v2385 = vadd.f32 %v2255, %v2372
    %v2386 = vadd.f32 %v2256, %v2372
    %v2387 = vadd.f32 %v2257, %v2372
    %v2388 = vadd.f32 %v2258, %v2372
    %v2389 = vadd.f32 %v2259, %v2372
    %v2390 = vadd.f32 %v2260, %v2372
    %v2391 = vadd.f32 %v2261, %v2372
    %v2392 = vadd.f32 %v2262, %v2372
    %v2393 = vadd.f32 %v2263, %v2372
    %v2394 = vadd.f32 %v2264, %v2372
    %v2395 = vadd.f32 %v2265, %v2372
    %v2396 = vadd.f32 %v2266, %v2372
    %v2397 = vadd.f32 %v2267, %v2372
    %v2398 = vadd.f32 %v2268, %v2372
    %v2399 = vadd.f32 %v2269, %v2372
    %v2400 = vadd.f32 %v2270, %v2372
    %v2401 = vadd.f32 %v2271, %v2372
    %v2402 = vadd.f32 %v2272, %v2372
    %v2403 = vadd.f32 %v2273, %v2372
    %v2404 = vadd.f32 %v2274, %v2372
    %v2405 = vadd.f32 %v2275, %v2372
    %v2406 = vadd.f32 %v2276, %v2372
    %v2407 = vadd.f32 %v2277, %v2372
    %v2408 = vadd.f32 %v2278, %v2372
    %v2409 = vadd.f32 %v2279, %v2372
    %v2410 = vadd.f32 %v2280, %v2372
    %v2411 = vadd.f32 %v2281, %v2372
    %v2412 = vadd.f32 %v2282, %v2372
    %v2413 = vadd.f32 %v2283, %v2372
    %v2414 = vadd.f32 %v2284, %v2372
    %v2415 = vadd.f32 %v2285, %v2372
    %v2416 = vadd.f32 %v2286, %v2372
    %v2417 = vadd.f32 %v2287, %v2372
    %v2418 = vadd.f32 %v2288, %v2372
    %v2419 = vadd.f32 %v2289, %v2372
    %v2420 = vadd.f32 %v2290, %v2372
    %v2421 = vadd.f32 %v2291, %v2372
    %v2422 = vadd.f32 %v2292, %v2372
    %v2423 = vadd.f32 %v2293, %v2372
    %v2424 = vadd.f32 %v2294, %v2372
    %v2425 = vadd.f32 %v2295, %v2372
    %v2426 = vadd.f32 %v2296, %v2372
    %v2427 = vadd.f32 %v2297, %v2372
    %v2428 = vadd.f32 %v2298, %v2372
    %v2429 = vadd.f32 %v2299, %v2372
    %v2430 = vadd.f32 %v2300, %v2372
    %v2431 = vadd.f32 %v2301, %v2372
    %v2432 = vadd.f32 %v2302, %v2372
    %v2433 = vadd.f32 %v2303, %v2372
    %v2434 = vadd.f32 %v2304, %v2372
    %v2435 = vadd.f32 %v2305, %v2372
    %v2436 = vadd.f32 %v2306, %v2372
    %v2437 = vadd.f32 %v2307, %v2372
    %v2438 = vadd.f32 %v2308, %v2372
    %v2439 = vadd.f32 %v2309, %v2372
    %v2440 = vadd.f32 %v2310, %v2372
    %v2441 = vadd.f32 %v2311, %v2372
    %v2442 = vadd.f32 %v2312, %v2372
    %v2443 = vadd.f32 %v2313, %v2372
    %v2444 = vadd.f32 %v2314, %v2372
    %v2445 = vadd.f32 %v2315, %v2372
    %v2446 = vadd.f32 %v2316, %v2372
    %v2447 = vadd.f32 %v2317, %v2372
    %v2448 = vadd.f32 %v2318, %v2372
    %v2449 = vadd.f32 %v2319, %v2372
    %v2450 = vadd.f32 %v2320, %v2372
    %v2451 = vadd.f32 %v2321, %v2372
    %v2452 = vadd.f32 %v2322, %v2372
    %v2453 = vadd.f32 %v2323, %v2372
    %v2454 = vadd.f32 %v2324, %v2372
    %v2455 = vadd.f32 %v2325, %v2372
    %v2456 = vadd.f32 %v2326, %v2372
    %v2457 = vadd.f32 %v2327, %v2372
    %v2458 = vadd.f32 %v2328, %v2372
    %v2459 = vadd.f32 %v2329, %v2372
    %v2460 = vadd.f32 %v2330, %v2372
    %v2461 = vadd.f32 %v2331, %v2372
    %v2462 = vadd.f32 %v2332, %v2372
    %v2463 = vadd.f32 %v2333, %v2372
    %v2464 = vadd.f32 %v2334, %v2372
    %v2465 = vadd.f32 %v2335, %v2372
    %v2466 = vadd.f32 %v2336, %v2372
    %v2467 = vadd.f32 %v2337, %v2372
    %v2468 = vadd.f32 %v2338, %v2372
    %v2469 = vadd.f32 %v2339, %v2372
    %v2470 = vadd.f32 %v2340, %v2372
    %v2471 = vadd.f32 %v2341, %v2372
    %v2472 = vadd.f32 %v2342, %v2372
    %v2473 = vadd.f32 %v2343, %v2372
    %v2474 = vadd.f32 %v2344, %v2372
    %v2475 = vadd.f32 %v2345, %v2372
    %v2476 = vadd.f32 %v2346, %v2372
    %v2477 = vadd.f32 %v2347, %v2372
    %v2478 = vadd.f32 %v2348, %v2372
    %v2479 = vadd.f32 %v2349, %v2372
    %v2480 = vadd.f32 %v2350, %v2372
    %v2481 = vadd.f32 %v2351, %v2372
    %v2482 = vadd.f32 %v2352, %v2372
    %v2483 = vadd.f32 %v2353, %v2372
    %v2484 = vadd.f32 %v2354, %v2372
    %v2485 = vadd.f32 %v2355, %v2372
    %v2486 = vadd.f32 %v2356, %v2372
    %v2487 = vadd.f32 %v2357, %v2372
    %v2488 = vadd.f32 %v2358, %v2372
    %v2489 = vadd.f32 %v2359, %v2372
    %v2490 = vadd.f32 %v2360, %v2372
    %v2491 = vadd.f32 %v2361, %v2372
    %v2492 = vadd.f32 %v2362, %v2372
    %v2493 = vadd.f32 %v2363, %v2372
    %v2494 = vadd.f32 %v2364, %v2372
    %v2495 = vadd.f32 %v2365, %v2372
    %v2496 = vadd.f32 %v2366, %v2372
    %v2497 = vadd.f32 %v2367, %v2372
    %v2498 = vadd.f32 %v2368, %v2372
    %v2499 = vadd.f32 %v2369, %v2372
    %v2500 = vadd.f32 %v2370, %v2372
    %2629 = vset.pattern.permute.xlu0 0
    %2630 = vperm.xlu0 %2629, %v2373
    %v2631 = vpop.permute.xlu0 %2630
    %2632 = vset.pattern.permute.xlu0 0
    %2633 = vperm.xlu0 %2632, %v2374
    %v2634 = vpop.permute.xlu0 %2633
    %2635 = vset.pattern.permute.xlu0 0
    %2636 = vperm.xlu0 %2635, %v2375
    %v2637 = vpop.permute.xlu0 %2636
    %2638 = vset.pattern.permute.xlu0 0
    %2639 = vperm.xlu0 %2638, %v2376
    %v2640 = vpop.permute.xlu0 %2639
    %2641 = vset.pattern.permute.xlu0 0
    %2642 = vperm.xlu0 %2641, %v2377
    %v2643 = vpop.permute.xlu0 %2642
    %2644 = vset.pattern.permute.xlu0 0
    %2645 = vperm.xlu0 %2644, %v2378
    %v2646 = vpop.permute.xlu0 %2645
    %2647 = vset.pattern.permute.xlu0 0
    %2648 = vperm.xlu0 %2647, %v2379
    %v2649 = vpop.permute.xlu0 %2648
    %2650 = vset.pattern.permute.xlu0 0
    %2651 = vperm.xlu0 %2650, %v2380
    %v2652 = vpop.permute.xlu0 %2651
    %2653 = vset.pattern.permute.xlu0 0
    %2654 = vperm.xlu0 %2653, %v2381
    %v2655 = vpop.permute.xlu0 %2654
    %2656 = vset.pattern.permute.xlu0 0
    %2657 = vperm.xlu0 %2656, %v2382
    %v2658 = vpop.permute.xlu0 %2657
    %2659 = vset.pattern.permute.xlu0 0
    %2660 = vperm.xlu0 %2659, %v2383
    %v2661 = vpop.permute.xlu0 %2660
    %2662 = vset.pattern.permute.xlu0 0
    %2663 = vperm.xlu0 %2662, %v2384
    %v2664 = vpop.permute.xlu0 %2663
    %2665 = vset.pattern.permute.xlu0 0
    %2666 = vperm.xlu0 %2665, %v2385
    %v2667 = vpop.permute.xlu0 %2666
    %2668 = vset.pattern.permute.xlu0 0
    %2669 = vperm.xlu0 %2668, %v2386
    %v2670 = vpop.permute.xlu0 %2669
    %2671 = vset.pattern.permute.xlu0 0
    %2672 = vperm.xlu0 %2671, %v2387
    %v2673 = vpop.permute.xlu0 %2672
    %2674 = vset.pattern.permute.xlu0 0
    %2675 = vperm.xlu0 %2674, %v2388
    %v2676 = vpop.permute.xlu0 %2675
    %2677 = vset.pattern.permute.xlu0 0
    %2678 = vperm.xlu0 %2677, %v2389
    %v2679 = vpop.permute.xlu0 %2678
    %2680 = vset.pattern.permute.xlu0 0
    %2681 = vperm.xlu0 %2680, %v2390
    %v2682 = vpop.permute.xlu0 %2681
    %2683 = vset.pattern.permute.xlu0 0
    %2684 = vperm.xlu0 %2683, %v2391
    %v2685 = vpop.permute.xlu0 %2684
    %2686 = vset.pattern.permute.xlu0 0
    %2687 = vperm.xlu0 %2686, %v2392
    %v2688 = vpop.permute.xlu0 %2687
    %2689 = vset.pattern.permute.xlu0 0
    %2690 = vperm.xlu0 %2689, %v2393
    %v2691 = vpop.permute.xlu0 %2690
    %2692 = vset.pattern.permute.xlu0 0
    %2693 = vperm.xlu0 %2692, %v2394
    %v2694 = vpop.permute.xlu0 %2693
    %2695 = vset.pattern.permute.xlu0 0
    %2696 = vperm.xlu0 %2695, %v2395
    %v2697 = vpop.permute.xlu0 %2696
    %2698 = vset.pattern.permute.xlu0 0
    %2699 = vperm.xlu0 %2698, %v2396
    %v2700 = vpop.permute.xlu0 %2699
    %2701 = vset.pattern.permute.xlu0 0
    %2702 = vperm.xlu0 %2701, %v2397
    %v2703 = vpop.permute.xlu0 %2702
    %2704 = vset.pattern.permute.xlu0 0
    %2705 = vperm.xlu0 %2704, %v2398
    %v2706 = vpop.permute.xlu0 %2705
    %2707 = vset.pattern.permute.xlu0 0
    %2708 = vperm.xlu0 %2707, %v2399
    %v2709 = vpop.permute.xlu0 %2708
    %2710 = vset.pattern.permute.xlu0 0
    %2711 = vperm.xlu0 %2710, %v2400
    %v2712 = vpop.permute.xlu0 %2711
    %2713 = vset.pattern.permute.xlu0 0
    %2714 = vperm.xlu0 %2713, %v2401
    %v2715 = vpop.permute.xlu0 %2714
    %2716 = vset.pattern.permute.xlu0 0
    %2717 = vperm.xlu0 %2716, %v2402
    %v2718 = vpop.permute.xlu0 %2717
    %2719 = vset.pattern.permute.xlu0 0
    %2720 = vperm.xlu0 %2719, %v2403
    %v2721 = vpop.permute.xlu0 %2720
    %2722 = vset.pattern.permute.xlu0 0
    %2723 = vperm.xlu0 %2722, %v2404
    %v2724 = vpop.permute.xlu0 %2723
    %2725 = vset.pattern.permute.xlu0 0
    %2726 = vperm.xlu0 %2725, %v2405
    %v2727 = vpop.permute.xlu0 %2726
    %2728 = vset.pattern.permute.xlu0 0
    %2729 = vperm.xlu0 %2728, %v2406
    %v2730 = vpop.permute.xlu0 %2729
    %2731 = vset.pattern.permute.xlu0 0
    %2732 = vperm.xlu0 %2731, %v2407
    %v2733 = vpop.permute.xlu0 %2732
    %2734 = vset.pattern.permute.xlu0 0
    %2735 = vperm.xlu0 %2734, %v2408
    %v2736 = vpop.permute.xlu0 %2735
    %2737 = vset.pattern.permute.xlu0 0
    %2738 = vperm.xlu0 %2737, %v2409
    %v2739 = vpop.permute.xlu0 %2738
    %2740 = vset.pattern.permute.xlu0 0
    %2741 = vperm.xlu0 %2740, %v2410
    %v2742 = vpop.permute.xlu0 %2741
    %2743 = vset.pattern.permute.xlu0 0
    %2744 = vperm.xlu0 %2743, %v2411
    %v2745 = vpop.permute.xlu0 %2744
    %2746 = vset.pattern.permute.xlu0 0
    %2747 = vperm.xlu0 %2746, %v2412
    %v2748 = vpop.permute.xlu0 %2747
    %2749 = vset.pattern.permute.xlu0 0
    %2750 = vperm.xlu0 %2749, %v2413
    %v2751 = vpop.permute.xlu0 %2750
    %2752 = vset.pattern.permute.xlu0 0
    %2753 = vperm.xlu0 %2752, %v2414
    %v2754 = vpop.permute.xlu0 %2753
    %2755 = vset.pattern.permute.xlu0 0
    %2756 = vperm.xlu0 %2755, %v2415
    %v2757 = vpop.permute.xlu0 %2756
    %2758 = vset.pattern.permute.xlu0 0
    %2759 = vperm.xlu0 %2758, %v2416
    %v2760 = vpop.permute.xlu0 %2759
    %2761 = vset.pattern.permute.xlu0 0
    %2762 = vperm.xlu0 %2761, %v2417
    %v2763 = vpop.permute.xlu0 %2762
    %2764 = vset.pattern.permute.xlu0 0
    %2765 = vperm.xlu0 %2764, %v2418
    %v2766 = vpop.permute.xlu0 %2765
    %2767 = vset.pattern.permute.xlu0 0
    %2768 = vperm.xlu0 %2767, %v2419
    %v2769 = vpop.permute.xlu0 %2768
    %2770 = vset.pattern.permute.xlu0 0
    %2771 = vperm.xlu0 %2770, %v2420
    %v2772 = vpop.permute.xlu0 %2771
    %2773 = vset.pattern.permute.xlu0 0
    %2774 = vperm.xlu0 %2773, %v2421
    %v2775 = vpop.permute.xlu0 %2774
    %2776 = vset.pattern.permute.xlu0 0
    %2777 = vperm.xlu0 %2776, %v2422
    %v2778 = vpop.permute.xlu0 %2777
    %2779 = vset.pattern.permute.xlu0 0
    %2780 = vperm.xlu0 %2779, %v2423
    %v2781 = vpop.permute.xlu0 %2780
    %2782 = vset.pattern.permute.xlu0 0
    %2783 = vperm.xlu0 %2782, %v2424
    %v2784 = vpop.permute.xlu0 %2783
    %2785 = vset.pattern.permute.xlu0 0
    %2786 = vperm.xlu0 %2785, %v2425
    %v2787 = vpop.permute.xlu0 %2786
    %2788 = vset.pattern.permute.xlu0 0
    %2789 = vperm.xlu0 %2788, %v2426
    %v2790 = vpop.permute.xlu0 %2789
    %2791 = vset.pattern.permute.xlu0 0
    %2792 = vperm.xlu0 %2791, %v2427
    %v2793 = vpop.permute.xlu0 %2792
    %2794 = vset.pattern.permute.xlu0 0
    %2795 = vperm.xlu0 %2794, %v2428
    %v2796 = vpop.permute.xlu0 %2795
    %2797 = vset.pattern.permute.xlu0 0
    %2798 = vperm.xlu0 %2797, %v2429
    %v2799 = vpop.permute.xlu0 %2798
    %2800 = vset.pattern.permute.xlu0 0
    %2801 = vperm.xlu0 %2800, %v2430
    %v2802 = vpop.permute.xlu0 %2801
    %2803 = vset.pattern.permute.xlu0 0
    %2804 = vperm.xlu0 %2803, %v2431
    %v2805 = vpop.permute.xlu0 %2804
    %2806 = vset.pattern.permute.xlu0 0
    %2807 = vperm.xlu0 %2806, %v2432
    %v2808 = vpop.permute.xlu0 %2807
    %2809 = vset.pattern.permute.xlu0 0
    %2810 = vperm.xlu0 %2809, %v2433
    %v2811 = vpop.permute.xlu0 %2810
    %2812 = vset.pattern.permute.xlu0 0
    %2813 = vperm.xlu0 %2812, %v2434
    %v2814 = vpop.permute.xlu0 %2813
    %2815 = vset.pattern.permute.xlu0 0
    %2816 = vperm.xlu0 %2815, %v2435
    %v2817 = vpop.permute.xlu0 %2816
    %2818 = vset.pattern.permute.xlu0 0
    %2819 = vperm.xlu0 %2818, %v2436
    %v2820 = vpop.permute.xlu0 %2819
    %2821 = vset.pattern.permute.xlu0 0
    %2822 = vperm.xlu0 %2821, %v2437
    %v2823 = vpop.permute.xlu0 %2822
    %2824 = vset.pattern.permute.xlu0 0
    %2825 = vperm.xlu0 %2824, %v2438
    %v2826 = vpop.permute.xlu0 %2825
    %2827 = vset.pattern.permute.xlu0 0
    %2828 = vperm.xlu0 %2827, %v2439
    %v2829 = vpop.permute.xlu0 %2828
    %2830 = vset.pattern.permute.xlu0 0
    %2831 = vperm.xlu0 %2830, %v2440
    %v2832 = vpop.permute.xlu0 %2831
    %2833 = vset.pattern.permute.xlu0 0
    %2834 = vperm.xlu0 %2833, %v2441
    %v2835 = vpop.permute.xlu0 %2834
    %2836 = vset.pattern.permute.xlu0 0
    %2837 = vperm.xlu0 %2836, %v2442
    %v2838 = vpop.permute.xlu0 %2837
    %2839 = vset.pattern.permute.xlu0 0
    %2840 = vperm.xlu0 %2839, %v2443
    %v2841 = vpop.permute.xlu0 %2840
    %2842 = vset.pattern.permute.xlu0 0
    %2843 = vperm.xlu0 %2842, %v2444
    %v2844 = vpop.permute.xlu0 %2843
    %2845 = vset.pattern.permute.xlu0 0
    %2846 = vperm.xlu0 %2845, %v2445
    %v2847 = vpop.permute.xlu0 %2846
    %2848 = vset.pattern.permute.xlu0 0
    %2849 = vperm.xlu0 %2848, %v2446
    %v2850 = vpop.permute.xlu0 %2849
    %2851 = vset.pattern.permute.xlu0 0
    %2852 = vperm.xlu0 %2851, %v2447
    %v2853 = vpop.permute.xlu0 %2852
    %2854 = vset.pattern.permute.xlu0 0
    %2855 = vperm.xlu0 %2854, %v2448
    %v2856 = vpop.permute.xlu0 %2855
    %2857 = vset.pattern.permute.xlu0 0
    %2858 = vperm.xlu0 %2857, %v2449
    %v2859 = vpop.permute.xlu0 %2858
    %2860 = vset.pattern.permute.xlu0 0
    %2861 = vperm.xlu0 %2860, %v2450
    %v2862 = vpop.permute.xlu0 %2861
    %2863 = vset.pattern.permute.xlu0 0
    %2864 = vperm.xlu0 %2863, %v2451
    %v2865 = vpop.permute.xlu0 %2864
    %2866 = vset.pattern.permute.xlu0 0
    %2867 = vperm.xlu0 %2866, %v2452
    %v2868 = vpop.permute.xlu0 %2867
    %2869 = vset.pattern.permute.xlu0 0
    %2870 = vperm.xlu0 %2869, %v2453
    %v2871 = vpop.permute.xlu0 %2870
    %2872 = vset.pattern.permute.xlu0 0
    %2873 = vperm.xlu0 %2872, %v2454
    %v2874 = vpop.permute.xlu0 %2873
    %2875 = vset.pattern.permute.xlu0 0
    %2876 = vperm.xlu0 %2875, %v2455
    %v2877 = vpop.permute.xlu0 %2876
    %2878 = vset.pattern.permute.xlu0 0
    %2879 = vperm.xlu0 %2878, %v2456
    %v2880 = vpop.permute.xlu0 %2879
    %2881 = vset.pattern.permute.xlu0 0
    %2882 = vperm.xlu0 %2881, %v2457
    %v2883 = vpop.permute.xlu0 %2882
    %2884 = vset.pattern.permute.xlu0 0
    %2885 = vperm.xlu0 %2884, %v2458
    %v2886 = vpop.permute.xlu0 %2885
    %2887 = vset.pattern.permute.xlu0 0
    %2888 = vperm.xlu0 %2887, %v2459
    %v2889 = vpop.permute.xlu0 %2888
    %2890 = vset.pattern.permute.xlu0 0
    %2891 = vperm.xlu0 %2890, %v2460
    %v2892 = vpop.permute.xlu0 %2891
    %2893 = vset.pattern.permute.xlu0 0
    %2894 = vperm.xlu0 %2893, %v2461
    %v2895 = vpop.permute.xlu0 %2894
    %2896 = vset.pattern.permute.xlu0 0
    %2897 = vperm.xlu0 %2896, %v2462
    %v2898 = vpop.permute.xlu0 %2897
    %2899 = vset.pattern.permute.xlu0 0
    %2900 = vperm.xlu0 %2899, %v2463
    %v2901 = vpop.permute.xlu0 %2900
    %2902 = vset.pattern.permute.xlu0 0
    %2903 = vperm.xlu0 %2902, %v2464
    %v2904 = vpop.permute.xlu0 %2903
    %2905 = vset.pattern.permute.xlu0 0
    %2906 = vperm.xlu0 %2905, %v2465
    %v2907 = vpop.permute.xlu0 %2906
    %2908 = vset.pattern.permute.xlu0 0
    %2909 = vperm.xlu0 %2908, %v2466
    %v2910 = vpop.permute.xlu0 %2909
    %2911 = vset.pattern.permute.xlu0 0
    %2912 = vperm.xlu0 %2911, %v2467
    %v2913 = vpop.permute.xlu0 %2912
    %2914 = vset.pattern.permute.xlu0 0
    %2915 = vperm.xlu0 %2914, %v2468
    %v2916 = vpop.permute.xlu0 %2915
    %2917 = vset.pattern.permute.xlu0 0
    %2918 = vperm.xlu0 %2917, %v2469
    %v2919 = vpop.permute.xlu0 %2918
    %2920 = vset.pattern.permute.xlu0 0
    %2921 = vperm.xlu0 %2920, %v2470
    %v2922 = vpop.permute.xlu0 %2921
    %2923 = vset.pattern.permute.xlu0 0
    %2924 = vperm.xlu0 %2923, %v2471
    %v2925 = vpop.permute.xlu0 %2924
    %2926 = vset.pattern.permute.xlu0 0
    %2927 = vperm.xlu0 %2926, %v2472
    %v2928 = vpop.permute.xlu0 %2927
    %2929 = vset.pattern.permute.xlu0 0
    %2930 = vperm.xlu0 %2929, %v2473
    %v2931 = vpop.permute.xlu0 %2930
    %2932 = vset.pattern.permute.xlu0 0
    %2933 = vperm.xlu0 %2932, %v2474
    %v2934 = vpop.permute.xlu0 %2933
    %2935 = vset.pattern.permute.xlu0 0
    %2936 = vperm.xlu0 %2935, %v2475
    %v2937 = vpop.permute.xlu0 %2936
    %2938 = vset.pattern.permute.xlu0 0
    %2939 = vperm.xlu0 %2938, %v2476
    %v2940 = vpop.permute.xlu0 %2939
    %2941 = vset.pattern.permute.xlu0 0
    %2942 = vperm.xlu0 %2941, %v2477
    %v2943 = vpop.permute.xlu0 %2942
    %2944 = vset.pattern.permute.xlu0 0
    %2945 = vperm.xlu0 %2944, %v2478
    %v2946 = vpop.permute.xlu0 %2945
    %2947 = vset.pattern.permute.xlu0 0
    %2948 = vperm.xlu0 %2947, %v2479
    %v2949 = vpop.permute.xlu0 %2948
    %2950 = vset.pattern.permute.xlu0 0
    %2951 = vperm.xlu0 %2950, %v2480
    %v2952 = vpop.permute.xlu0 %2951
    %2953 = vset.pattern.permute.xlu0 0
    %2954 = vperm.xlu0 %2953, %v2481
    %v2955 = vpop.permute.xlu0 %2954
    %2956 = vset.pattern.permute.xlu0 0
    %2957 = vperm.xlu0 %2956, %v2482
    %v2958 = vpop.permute.xlu0 %2957
    %2959 = vset.pattern.permute.xlu0 0
    %2960 = vperm.xlu0 %2959, %v2483
    %v2961 = vpop.permute.xlu0 %2960
    %2962 = vset.pattern.permute.xlu0 0
    %2963 = vperm.xlu0 %2962, %v2484
    %v2964 = vpop.permute.xlu0 %2963
    %2965 = vset.pattern.permute.xlu0 0
    %2966 = vperm.xlu0 %2965, %v2485
    %v2967 = vpop.permute.xlu0 %2966
    %2968 = vset.pattern.permute.xlu0 0
    %2969 = vperm.xlu0 %2968, %v2486
    %v2970 = vpop.permute.xlu0 %2969
    %2971 = vset.pattern.permute.xlu0 0
    %2972 = vperm.xlu0 %2971, %v2487
    %v2973 = vpop.permute.xlu0 %2972
    %2974 = vset.pattern.permute.xlu0 0
    %2975 = vperm.xlu0 %2974, %v2488
    %v2976 = vpop.permute.xlu0 %2975
    %2977 = vset.pattern.permute.xlu0 0
    %2978 = vperm.xlu0 %2977, %v2489
    %v2979 = vpop.permute.xlu0 %2978
    %2980 = vset.pattern.permute.xlu0 0
    %2981 = vperm.xlu0 %2980, %v2490
    %v2982 = vpop.permute.xlu0 %2981
    %2983 = vset.pattern.permute.xlu0 0
    %2984 = vperm.xlu0 %2983, %v2491
    %v2985 = vpop.permute.xlu0 %2984
    %2986 = vset.pattern.permute.xlu0 0
    %2987 = vperm.xlu0 %2986, %v2492
    %v2988 = vpop.permute.xlu0 %2987
    %2989 = vset.pattern.permute.xlu0 0
    %2990 = vperm.xlu0 %2989, %v2493
    %v2991 = vpop.permute.xlu0 %2990
    %2992 = vset.pattern.permute.xlu0 0
    %2993 = vperm.xlu0 %2992, %v2494
    %v2994 = vpop.permute.xlu0 %2993
    %2995 = vset.pattern.permute.xlu0 0
    %2996 = vperm.xlu0 %2995, %v2495
    %v2997 = vpop.permute.xlu0 %2996
    %2998 = vset.pattern.permute.xlu0 0
    %2999 = vperm.xlu0 %2998, %v2496
    %v3000 = vpop.permute.xlu0 %2999
    %3001 = vset.pattern.permute.xlu0 0
    %3002 = vperm.xlu0 %3001, %v2497
    %v3003 = vpop.permute.xlu0 %3002
    %3004 = vset.pattern.permute.xlu0 0
    %3005 = vperm.xlu0 %3004, %v2498
    %v3006 = vpop.permute.xlu0 %3005
    %3007 = vset.pattern.permute.xlu0 0
    %3008 = vperm.xlu0 %3007, %v2499
    %v3009 = vpop.permute.xlu0 %3008
    %3010 = vset.pattern.permute.xlu0 0
    %3011 = vperm.xlu0 %3010, %v2500
    %v3012 = vpop.permute.xlu0 %3011
    %v3013 = vlaneseq
    %v3014 = vand.u32 %v3013, 127
    %v3015 = vperm.slane %v2631, %v3014
    %v3016 = vadd.s32 %v3014, 4294967288
    %v3017 = vperm.slane %v2634, %v3016
    %vm3018 = vcmask 130112
    %v3019 = vsel %vm3018, %v3017, %v3015
    %v3020 = vadd.s32 %v3014, 4294967280
    %v3021 = vperm.slane %v2637, %v3020
    %vm3022 = vcmask 195712
    %v3023 = vsel %vm3022, %v3021, %v3019
    %v3024 = vadd.s32 %v3014, 4294967272
    %v3025 = vperm.slane %v2640, %v3024
    %vm3026 = vcmask 261312
    %v3027 = vsel %vm3026, %v3025, %v3023
    %v3028 = vadd.s32 %v3014, 4294967264
    %v3029 = vperm.slane %v2643, %v3028
    %vm3030 = vcmask 326912
    %v3031 = vsel %vm3030, %v3029, %v3027
    %v3032 = vadd.s32 %v3014, 4294967256
    %v3033 = vperm.slane %v2646, %v3032
    %vm3034 = vcmask 392512
    %v3035 = vsel %vm3034, %v3033, %v3031
    %v3036 = vadd.s32 %v3014, 4294967248
    %v3037 = vperm.slane %v2649, %v3036
    %vm3038 = vcmask 458112
    %v3039 = vsel %vm3038, %v3037, %v3035
    %v3040 = vadd.s32 %v3014, 4294967240
    %v3041 = vperm.slane %v2652, %v3040
    %vm3042 = vcmask 523712
    %v3043 = vsel %vm3042, %v3041, %v3039
    %v3044 = vadd.s32 %v3014, 4294967232
    %v3045 = vperm.slane %v2655, %v3044
    %vm3046 = vcmask 589312
    %v3047 = vsel %vm3046, %v3045, %v3043
    %v3048 = vadd.s32 %v3014, 4294967224
    %v3049 = vperm.slane %v2658, %v3048
    %vm3050 = vcmask 654912
    %v3051 = vsel %vm3050, %v3049, %v3047
    %v3052 = vadd.s32 %v3014, 4294967216
    %v3053 = vperm.slane %v2661, %v3052
    %vm3054 = vcmask 720512
    %v3055 = vsel %vm3054, %v3053, %v3051
    %v3056 = vadd.s32 %v3014, 4294967208
    %v3057 = vperm.slane %v2664, %v3056
    %vm3058 = vcmask 786112
    %v3059 = vsel %vm3058, %v3057, %v3055
    %v3060 = vadd.s32 %v3014, 4294967200
    %v3061 = vperm.slane %v2667, %v3060
    %vm3062 = vcmask 851712
    %v3063 = vsel %vm3062, %v3061, %v3059
    %v3064 = vadd.s32 %v3014, 4294967192
    %v3065 = vperm.slane %v2670, %v3064
    %vm3066 = vcmask 917312
    %v3067 = vsel %vm3066, %v3065, %v3063
    %v3068 = vadd.s32 %v3014, 4294967184
    %v3069 = vperm.slane %v2673, %v3068
    %vm3070 = vcmask 982912
    %v3071 = vsel %vm3070, %v3069, %v3067
    %v3072 = vadd.s32 %v3014, 4294967176
    %v3073 = vperm.slane %v2676, %v3072
    %vm3074 = vcmask 1048512
    %v3075 = vsel %vm3074, %v3073, %v3071
    %v3076 = vperm.slane %v2679, %v3014
    %v3077 = vperm.slane %v2682, %v3016
    %v3078 = vsel %vm3018, %v3077, %v3076
    %v3079 = vperm.slane %v2685, %v3020
    %v3080 = vsel %vm3022, %v3079, %v3078
    %v3081 = vperm.slane %v2688, %v3024
    %v3082 = vsel %vm3026, %v3081, %v3080
    %v3083 = vperm.slane %v2691, %v3028
    %v3084 = vsel %vm3030, %v3083, %v3082
    %v3085 = vperm.slane %v2694, %v3032
    %v3086 = vsel %vm3034, %v3085, %v3084
    %v3087 = vperm.slane %v2697, %v3036
    %v3088 = vsel %vm3038, %v3087, %v3086
    %v3089 = vperm.slane %v2700, %v3040
    %v3090 = vsel %vm3042, %v3089, %v3088
    %v3091 = vperm.slane %v2703, %v3044
    %v3092 = vsel %vm3046, %v3091, %v3090
    %v3093 = vperm.slane %v2706, %v3048
    %v3094 = vsel %vm3050, %v3093, %v3092
    %v3095 = vperm.slane %v2709, %v3052
    %v3096 = vsel %vm3054, %v3095, %v3094
    %v3097 = vperm.slane %v2712, %v3056
    %v3098 = vsel %vm3058, %v3097, %v3096
    %v3099 = vperm.slane %v2715, %v3060
    %v3100 = vsel %vm3062, %v3099, %v3098
    %v3101 = vperm.slane %v2718, %v3064
    %v3102 = vsel %vm3066, %v3101, %v3100
    %v3103 = vperm.slane %v2721, %v3068
    %v3104 = vsel %vm3070, %v3103, %v3102
    %v3105 = vperm.slane %v2724, %v3072
    %v3106 = vsel %vm3074, %v3105, %v3104
    %v3107 = vperm.slane %v2727, %v3014
    %v3108 = vperm.slane %v2730, %v3016
    %v3109 = vsel %vm3018, %v3108, %v3107
    %v3110 = vperm.slane %v2733, %v3020
    %v3111 = vsel %vm3022, %v3110, %v3109
    %v3112 = vperm.slane %v2736, %v3024
    %v3113 = vsel %vm3026, %v3112, %v3111
    %v3114 = vperm.slane %v2739, %v3028
    %v3115 = vsel %vm3030, %v3114, %v3113
    %v3116 = vperm.slane %v2742, %v3032
    %v3117 = vsel %vm3034, %v3116, %v3115
    %v3118 = vperm.slane %v2745, %v3036
    %v3119 = vsel %vm3038, %v3118, %v3117
    %v3120 = vperm.slane %v2748, %v3040
    %v3121 = vsel %vm3042, %v3120, %v3119
    %v3122 = vperm.slane %v2751, %v3044
    %v3123 = vsel %vm3046, %v3122, %v3121
    %v3124 = vperm.slane %v2754, %v3048
    %v3125 = vsel %vm3050, %v3124, %v3123
    %v3126 = vperm.slane %v2757, %v3052
    %v3127 = vsel %vm3054, %v3126, %v3125
    %v3128 = vperm.slane %v2760, %v3056
    %v3129 = vsel %vm3058, %v3128, %v3127
    %v3130 = vperm.slane %v2763, %v3060
    %v3131 = vsel %vm3062, %v3130, %v3129
    %v3132 = vperm.slane %v2766, %v3064
    %v3133 = vsel %vm3066, %v3132, %v3131
    %v3134 = vperm.slane %v2769, %v3068
    %v3135 = vsel %vm3070, %v3134, %v3133
    %v3136 = vperm.slane %v2772, %v3072
    %v3137 = vsel %vm3074, %v3136, %v3135
    %v3138 = vperm.slane %v2775, %v3014
    %v3139 = vperm.slane %v2778, %v3016
    %v3140 = vsel %vm3018, %v3139, %v3138
    %v3141 = vperm.slane %v2781, %v3020
    %v3142 = vsel %vm3022, %v3141, %v3140
    %v3143 = vperm.slane %v2784, %v3024
    %v3144 = vsel %vm3026, %v3143, %v3142
    %v3145 = vperm.slane %v2787, %v3028
    %v3146 = vsel %vm3030, %v3145, %v3144
    %v3147 = vperm.slane %v2790, %v3032
    %v3148 = vsel %vm3034, %v3147, %v3146
    %v3149 = vperm.slane %v2793, %v3036
    %v3150 = vsel %vm3038, %v3149, %v3148
    %v3151 = vperm.slane %v2796, %v3040
    %v3152 = vsel %vm3042, %v3151, %v3150
    %v3153 = vperm.slane %v2799, %v3044
    %v3154 = vsel %vm3046, %v3153, %v3152
    %v3155 = vperm.slane %v2802, %v3048
    %v3156 = vsel %vm3050, %v3155, %v3154
    %v3157 = vperm.slane %v2805, %v3052
    %v3158 = vsel %vm3054, %v3157, %v3156
    %v3159 = vperm.slane %v2808, %v3056
    %v3160 = vsel %vm3058, %v3159, %v3158
    %v3161 = vperm.slane %v2811, %v3060
    %v3162 = vsel %vm3062, %v3161, %v3160
    %v3163 = vperm.slane %v2814, %v3064
    %v3164 = vsel %vm3066, %v3163, %v3162
    %v3165 = vperm.slane %v2817, %v3068
    %v3166 = vsel %vm3070, %v3165, %v3164
    %v3167 = vperm.slane %v2820, %v3072
    %v3168 = vsel %vm3074, %v3167, %v3166
    %v3169 = vperm.slane %v2823, %v3014
    %v3170 = vperm.slane %v2826, %v3016
    %v3171 = vsel %vm3018, %v3170, %v3169
    %v3172 = vperm.slane %v2829, %v3020
    %v3173 = vsel %vm3022, %v3172, %v3171
    %v3174 = vperm.slane %v2832, %v3024
    %v3175 = vsel %vm3026, %v3174, %v3173
    %v3176 = vperm.slane %v2835, %v3028
    %v3177 = vsel %vm3030, %v3176, %v3175
    %v3178 = vperm.slane %v2838, %v3032
    %v3179 = vsel %vm3034, %v3178, %v3177
    %v3180 = vperm.slane %v2841, %v3036
    %v3181 = vsel %vm3038, %v3180, %v3179
    %v3182 = vperm.slane %v2844, %v3040
    %v3183 = vsel %vm3042, %v3182, %v3181
    %v3184 = vperm.slane %v2847, %v3044
    %v3185 = vsel %vm3046, %v3184, %v3183
    %v3186 = vperm.slane %v2850, %v3048
    %v3187 = vsel %vm3050, %v3186, %v3185
    %v3188 = vperm.slane %v2853, %v3052
    %v3189 = vsel %vm3054, %v3188, %v3187
    %v3190 = vperm.slane %v2856, %v3056
    %v3191 = vsel %vm3058, %v3190, %v3189
    %v3192 = vperm.slane %v2859, %v3060
    %v3193 = vsel %vm3062, %v3192, %v3191
    %v3194 = vperm.slane %v2862, %v3064
    %v3195 = vsel %vm3066, %v3194, %v3193
    %v3196 = vperm.slane %v2865, %v3068
    %v3197 = vsel %vm3070, %v3196, %v3195
    %v3198 = vperm.slane %v2868, %v3072
    %v3199 = vsel %vm3074, %v3198, %v3197
    %v3200 = vperm.slane %v2871, %v3014
    %v3201 = vperm.slane %v2874, %v3016
    %v3202 = vsel %vm3018, %v3201, %v3200
    %v3203 = vperm.slane %v2877, %v3020
    %v3204 = vsel %vm3022, %v3203, %v3202
    %v3205 = vperm.slane %v2880, %v3024
    %v3206 = vsel %vm3026, %v3205, %v3204
    %v3207 = vperm.slane %v2883, %v3028
    %v3208 = vsel %vm3030, %v3207, %v3206
    %v3209 = vperm.slane %v2886, %v3032
    %v3210 = vsel %vm3034, %v3209, %v3208
    %v3211 = vperm.slane %v2889, %v3036
    %v3212 = vsel %vm3038, %v3211, %v3210
    %v3213 = vperm.slane %v2892, %v3040
    %v3214 = vsel %vm3042, %v3213, %v3212
    %v3215 = vperm.slane %v2895, %v3044
    %v3216 = vsel %vm3046, %v3215, %v3214
    %v3217 = vperm.slane %v2898, %v3048
    %v3218 = vsel %vm3050, %v3217, %v3216
    %v3219 = vperm.slane %v2901, %v3052
    %v3220 = vsel %vm3054, %v3219, %v3218
    %v3221 = vperm.slane %v2904, %v3056
    %v3222 = vsel %vm3058, %v3221, %v3220
    %v3223 = vperm.slane %v2907, %v3060
    %v3224 = vsel %vm3062, %v3223, %v3222
    %v3225 = vperm.slane %v2910, %v3064
    %v3226 = vsel %vm3066, %v3225, %v3224
    %v3227 = vperm.slane %v2913, %v3068
    %v3228 = vsel %vm3070, %v3227, %v3226
    %v3229 = vperm.slane %v2916, %v3072
    %v3230 = vsel %vm3074, %v3229, %v3228
    %v3231 = vperm.slane %v2919, %v3014
    %v3232 = vperm.slane %v2922, %v3016
    %v3233 = vsel %vm3018, %v3232, %v3231
    %v3234 = vperm.slane %v2925, %v3020
    %v3235 = vsel %vm3022, %v3234, %v3233
    %v3236 = vperm.slane %v2928, %v3024
    %v3237 = vsel %vm3026, %v3236, %v3235
    %v3238 = vperm.slane %v2931, %v3028
    %v3239 = vsel %vm3030, %v3238, %v3237
    %v3240 = vperm.slane %v2934, %v3032
    %v3241 = vsel %vm3034, %v3240, %v3239
    %v3242 = vperm.slane %v2937, %v3036
    %v3243 = vsel %vm3038, %v3242, %v3241
    %v3244 = vperm.slane %v2940, %v3040
    %v3245 = vsel %vm3042, %v3244, %v3243
    %v3246 = vperm.slane %v2943, %v3044
    %v3247 = vsel %vm3046, %v3246, %v3245
    %v3248 = vperm.slane %v2946, %v3048
    %v3249 = vsel %vm3050, %v3248, %v3247
    %v3250 = vperm.slane %v2949, %v3052
    %v3251 = vsel %vm3054, %v3250, %v3249
    %v3252 = vperm.slane %v2952, %v3056
    %v3253 = vsel %vm3058, %v3252, %v3251
    %v3254 = vperm.slane %v2955, %v3060
    %v3255 = vsel %vm3062, %v3254, %v3253
    %v3256 = vperm.slane %v2958, %v3064
    %v3257 = vsel %vm3066, %v3256, %v3255
    %v3258 = vperm.slane %v2961, %v3068
    %v3259 = vsel %vm3070, %v3258, %v3257
    %v3260 = vperm.slane %v2964, %v3072
    %v3261 = vsel %vm3074, %v3260, %v3259
    %v3262 = vperm.slane %v2967, %v3014
    %v3263 = vperm.slane %v2970, %v3016
    %v3264 = vsel %vm3018, %v3263, %v3262
    %v3265 = vperm.slane %v2973, %v3020
    %v3266 = vsel %vm3022, %v3265, %v3264
    %v3267 = vperm.slane %v2976, %v3024
    %v3268 = vsel %vm3026, %v3267, %v3266
    %v3269 = vperm.slane %v2979, %v3028
    %v3270 = vsel %vm3030, %v3269, %v3268
    %v3271 = vperm.slane %v2982, %v3032
    %v3272 = vsel %vm3034, %v3271, %v3270
    %v3273 = vperm.slane %v2985, %v3036
    %v3274 = vsel %vm3038, %v3273, %v3272
    %v3275 = vperm.slane %v2988, %v3040
    %v3276 = vsel %vm3042, %v3275, %v3274
    %v3277 = vperm.slane %v2991, %v3044
    %v3278 = vsel %vm3046, %v3277, %v3276
    %v3279 = vperm.slane %v2994, %v3048
    %v3280 = vsel %vm3050, %v3279, %v3278
    %v3281 = vperm.slane %v2997, %v3052
    %v3282 = vsel %vm3054, %v3281, %v3280
    %v3283 = vperm.slane %v3000, %v3056
    %v3284 = vsel %vm3058, %v3283, %v3282
    %v3285 = vperm.slane %v3003, %v3060
    %v3286 = vsel %vm3062, %v3285, %v3284
    %v3287 = vperm.slane %v3006, %v3064
    %v3288 = vsel %vm3066, %v3287, %v3286
    %v3289 = vperm.slane %v3009, %v3068
    %v3290 = vsel %vm3070, %v3289, %v3288
    %v3291 = vperm.slane %v3012, %v3072
    %v3292 = vsel %vm3074, %v3291, %v3290
    %vm3293 = vcmask 1041409
    %v3294 = vsel %vm3293, %v3106, %v3075
    %vm3295 = vcmask 1042434
    %v3296 = vsel %vm3295, %v3137, %v3294
    %vm3297 = vcmask 1043459
    %v3298 = vsel %vm3297, %v3168, %v3296
    %vm3299 = vcmask 1044484
    %v3300 = vsel %vm3299, %v3199, %v3298
    %vm3301 = vcmask 1045509
    %v3302 = vsel %vm3301, %v3230, %v3300
    %vm3303 = vcmask 1046534
    %v3304 = vsel %vm3303, %v3261, %v3302
    %vm3305 = vcmask 1047559
    %v3306 = vsel %vm3305, %v3292, %v3304
    %3308 = vst [vmem:[#allocation3] sm:$0xff] %v3306
    // Predicated region
    $region66: #{tpu_custom_call.1} parent=1 // pred_check
      _
    $region67: #{tpu_custom_call.1} parent=1 // pred_check_branch
      %3310 = sbr.rel (0) target = $region69
    $region68: #{tpu_custom_call.1} parent=1 // pred_region
      %3312 = vsyncadd [#allocation4], 0
      %s3314 = sshll.u32 [#allocation3], 4
      %s3315 = int_to_ptr.vmem [resolvable:$true] %s3314
      %s3316 = sshll.u32 %s16, 4
      %s3317 = int_to_ptr.hbm [resolvable:$true] %s3316
      %3319 = dma.vmem_to_hbm [thread:$0]  %s3315, 128, %s3317, [#allocation4]
    $region69: #{tpu_custom_call.1} parent=1 // pred_fallthru
      _
    // Predicated region
    $region70: #{tpu_custom_call.1} parent=1 // pred_check
      _
    $region71: #{tpu_custom_call.1} parent=1 // pred_check_branch
      %3321 = sbr.rel (0) target = $region73
    $region72: #{tpu_custom_call.1} parent=1 // pred_region
      %3323 = dma.done [#allocation4], 128
    $region73: #{tpu_custom_call.1} parent=1 // pred_fallthru
      _
    %3324 = vsyncpa [#allocation4], 1

</llo_original>
